<compile_context>
chip_gen: v7x
topology: tpu7x:2x2x1
jax: 0.10.0
libtpu: 0.0.40
codegen_flags: <defaults>
</compile_context>

<pallas_src>
import math

import jax
import jax.numpy as jnp
from jax.experimental import pallas as pl
from jax.experimental.pallas import tpu as pltpu  # noqa: F401  (not required at these shapes)

B, S, D = 2, 8, 32          # batch, sequence length, d_model
H = 4                       # num heads
DK = D // H                 # head dim
N = B * S                   # fused token axis
INV_SQRT_DK = 1.0 / math.sqrt(DK)


def mha_kernel(xq_ref, xk_ref, xv_ref, w_ref, b_ref, wo_ref, bo_ref, o_ref):
    """
    xq_ref/xk_ref/xv_ref : (B, S, D)   raw query/key/value activations
    w_ref                : (3, D, D)   packed q/k/v projection weights (y = x @ w_i + b_i)
    b_ref                : (3, 1, D)   packed, lane-dense projection biases
    wo_ref               : (D, D)      output projection weight (y = x @ wo + bo)
    bo_ref               : (1, D)
    o_ref                : (N, D)
    """
    f32 = jnp.float32
    # Tile-aligned (free) merges of the leading batch dim into sublanes.
    xq = xq_ref[...].reshape(N, D)
    xk = xk_ref[...].reshape(N, D)
    xv = xv_ref[...].reshape(N, D)

    # ---- lane-dense Q/K/V projections: K=32 contraction, 32-lane outputs ----
    # Heads stay packed in the lane dimension here.
    # TODO(synk): on v6e/v7x, bf16 matmul operands would cut MXU passes ~3x but the
    #             rounding (~4e-3 rel) can exceed the 2e-3 test tolerance; kept f32.
    q = jnp.dot(xq, w_ref[0], preferred_element_type=f32) + b_ref[0]   # (N, D)
    k = jnp.dot(xk, w_ref[1], preferred_element_type=f32) + b_ref[1]
    v = jnp.dot(xv, w_ref[2], preferred_element_type=f32) + b_ref[2]

    # ---- split heads only where attention needs them: (N, H*DK) -> (H*B, S, DK) ----
    # Static lane slices + tile-aligned leading-dim reshapes; batch index z = h*B + b,
    # so the score tensor is (H*B, S, S): no cross-batch (B*S)^2 waste, no mask needed.
    def split_heads(t):
        return jnp.concatenate(
            [t[:, h * DK:(h + 1) * DK].reshape(B, S, DK) for h in range(H)],
            axis=0)

    qh = split_heads(q)                                                 # (H*B, S, DK)
    kh = split_heads(k)
    vh = split_heads(v)

    scores = jnp.einsum("zqd,zkd->zqk", qh, kh,
                        preferred_element_type=f32) * INV_SQRT_DK       # (H*B, S, S)
    # TODO(synk): external attention `mask` argument of forward() is not plumbed
    #             through (mask=None path only).
    scores = scores - jnp.max(scores, axis=-1, keepdims=True)
    e = jnp.exp(scores)
    p = e / jnp.sum(e, axis=-1, keepdims=True)      # exact normalization (review concern)
    # TODO(synk): attention dropout (p=0.1) is identity (inference / eval mode).

    ctx = jnp.einsum("zqk,zkd->zqd", p, vh, preferred_element_type=f32)  # (H*B, S, DK)

    # ---- merge heads back to lane-packed (N, H*DK), fused output projection ----
    ctx = jnp.concatenate(
        [ctx[h * B:(h + 1) * B].reshape(N, DK) for h in range(H)], axis=1)  # (N, D)
    out = jnp.dot(ctx, wo_ref[...], preferred_element_type=f32) + bo_ref[...]
    # TODO(synk): a (4,128) lane-dense store would avoid masked vst on v5e; skipped,
    #             negligible at this size and the in-kernel reshape is a relayout.
    o_ref[...] = out.astype(o_ref.dtype)


def pack_params(p):
    """One-time packing of torch-layout (out,in) nn.Linear params into kernel layout.

    Done at parameter-init time so the per-call host graph contains no
    transpose/reshape/concat kernels.
    """
    w_qkv = jnp.stack([p["wq"].T, p["wk"].T, p["wv"].T], axis=0)           # (3, D, D)
    b_qkv = jnp.stack([p["bq"], p["bk"], p["bv"]], axis=0).reshape(3, 1, D)
    return {"w_qkv": w_qkv, "b_qkv": b_qkv,
            "wo": p["wo"].T, "bo": p["bo"].reshape(1, D)}


def multi_headed_attention(query, key, value, packed):
    """query/key/value: (B, S, D).  `packed` comes from pack_params()."""
    nb, sl, _ = query.shape
    n = nb * sl
    flops = 2 * (3 * n * D * D + 2 * H * n * sl * DK + n * D * D)
    ce = pl.CostEstimate(
        flops=flops,
        transcendentals=H * n * sl,
        bytes_accessed=4 * (3 * n * D + 3 * D * D + 3 * D + D * D + D + n * D))

    # Single gridless pallas_call: at B=2, S=8, D=32 the kernel is launch/DMA-latency
    # bound, so one invocation with whole-array VMEM operands is optimal.
    # TODO(synk): when scaling S/B, add a (batch, kv-block) grid with online softmax
    #             and dimension_semantics=("parallel", "arbitrary"); on v7x also set
    #             vmem_limit_bytes explicitly (64 MiB physical VMEM).
    out = pl.pallas_call(
        mha_kernel,
        out_shape=jax.ShapeDtypeStruct((n, D), jnp.float32),
        cost_estimate=ce,
    )(query, key, value, packed["w_qkv"], packed["b_qkv"],
      packed["wo"], packed["bo"])
    return out.reshape(nb, sl, D)


def init_params(key):
    ks = jax.random.split(key, 8)
    w = lambda k: jax.random.normal(k, (D, D), jnp.float32) * 0.05   # torch (out, in)
    b = lambda k: jax.random.normal(k, (D,), jnp.float32) * 0.01
    # NOTE: MultiHeadedAttention.selector / time_reparam are defined in __init__
    # but never used in forward(), so they are intentionally omitted.
    return {
        "wq": w(ks[0]), "bq": b(ks[1]),
        "wk": w(ks[2]), "bk": b(ks[3]),
        "wv": w(ks[4]), "bv": b(ks[5]),
        "wo": w(ks[6]), "bo": b(ks[7]),
    }


def mha_ref(query, key, value, p):
    """Pure-JAX reference mirroring the PyTorch forward (mask=None, eval)."""
    hi = jax.lax.Precision.HIGHEST

    def lin(x, w, b):  # torch nn.Linear: y = x @ W^T + b
        return jnp.dot(x, w.T, precision=hi) + b

    nb = query.shape[0]
    q = lin(query, p["wq"], p["bq"]).reshape(nb, -1, H, DK).transpose(0, 2, 1, 3)
    k = lin(key,   p["wk"], p["bk"]).reshape(nb, -1, H, DK).transpose(0, 2, 1, 3)
    v = lin(value, p["wv"], p["bv"]).reshape(nb, -1, H, DK).transpose(0, 2, 1, 3)
    scores = jnp.einsum("bhqd,bhkd->bhqk", q, k, precision=hi) / math.sqrt(DK)
    pa = jax.nn.softmax(scores, axis=-1)
    x = jnp.einsum("bhqk,bhkd->bhqd", pa, v, precision=hi)
    x = x.transpose(0, 2, 1, 3).reshape(nb, -1, D)
    return lin(x, p["wo"], p["bo"])


if __name__ == "__main__":
    key = jax.random.PRNGKey(0)
    kx, kp = jax.random.split(key)
    x = jax.random.normal(kx, (B, S, D), jnp.float32)
    params = init_params(kp)
    packed = pack_params(params)        # one-time weight packing (not per call)

    out = multi_headed_attention(x, x, x, packed)   # self-attention, mask=None
    out = jax.block_until_ready(out)

    ref = mha_ref(x, x, x, params)
    assert out.shape == (B, S, D)
    err = jnp.max(jnp.abs(out - ref))
    assert jnp.allclose(out, ref, atol=2e-3, rtol=2e-3), f"max abs err {err}"
    print("KERNEL_OK")
</pallas_src>

<mosaic_0001>
module attributes {stable_mosaic.version = 11 : i64} {
  func.func @mha_kernel(%arg0: memref<2x8x32xf32, #tpu.memory_space<vmem>>, %arg1: memref<2x8x32xf32, #tpu.memory_space<vmem>>, %arg2: memref<2x8x32xf32, #tpu.memory_space<vmem>>, %arg3: memref<3x32x32xf32, #tpu.memory_space<vmem>>, %arg4: memref<3x1x32xf32, #tpu.memory_space<vmem>>, %arg5: memref<32x32xf32, #tpu.memory_space<vmem>>, %arg6: memref<1x32xf32, #tpu.memory_space<vmem>>, %arg7: memref<16x32xf32, #tpu.memory_space<vmem>>) attributes {dimension_semantics = [], scalar_prefetch = 0 : i64, scratch_operands = 0 : i64, tpu.core_type = #tpu.core_type<tc>} {
    %c0 = arith.constant 0 : index
    %c0_0 = arith.constant 0 : index
    %c0_1 = arith.constant 0 : index
    %0 = vector.load %arg0[%c0, %c0_0, %c0_1] : memref<2x8x32xf32, #tpu.memory_space<vmem>>, vector<2x8x32xf32>
    %1 = vector.shape_cast %0 : vector<2x8x32xf32> to vector<16x32xf32>
    %c0_2 = arith.constant 0 : index
    %c0_3 = arith.constant 0 : index
    %c0_4 = arith.constant 0 : index
    %2 = vector.load %arg1[%c0_2, %c0_3, %c0_4] : memref<2x8x32xf32, #tpu.memory_space<vmem>>, vector<2x8x32xf32>
    %3 = vector.shape_cast %2 : vector<2x8x32xf32> to vector<16x32xf32>
    %c0_5 = arith.constant 0 : index
    %c0_6 = arith.constant 0 : index
    %c0_7 = arith.constant 0 : index
    %4 = vector.load %arg2[%c0_5, %c0_6, %c0_7] : memref<2x8x32xf32, #tpu.memory_space<vmem>>, vector<2x8x32xf32>
    %5 = vector.shape_cast %4 : vector<2x8x32xf32> to vector<16x32xf32>
    %c0_8 = arith.constant 0 : index
    %c0_9 = arith.constant 0 : index
    %c0_10 = arith.constant 0 : index
    %6 = vector.load %arg3[%c0_8, %c0_9, %c0_10] : memref<3x32x32xf32, #tpu.memory_space<vmem>>, vector<1x32x32xf32>
    %7 = vector.shape_cast %6 : vector<1x32x32xf32> to vector<32x32xf32>
    %cst = arith.constant dense<0.000000e+00> : vector<16x32xf32>
    %8 = tpu.matmul %1, %7, %cst {dimension_numbers = #tpu.dot_dimension_numbers<[1], [0], [0], [1], [0, 0, 1, 1], [], []>} : vector<16x32xf32>, vector<32x32xf32>, vector<16x32xf32> -> vector<16x32xf32>
    %c0_11 = arith.constant 0 : index
    %c0_12 = arith.constant 0 : index
    %c0_13 = arith.constant 0 : index
    %9 = vector.load %arg4[%c0_11, %c0_12, %c0_13] : memref<3x1x32xf32, #tpu.memory_space<vmem>>, vector<1x1x32xf32>
    %10 = vector.shape_cast %9 : vector<1x1x32xf32> to vector<1x32xf32>
    %11 = vector.broadcast %10 : vector<1x32xf32> to vector<16x32xf32>
    %12 = arith.addf %8, %11 : vector<16x32xf32>
    %c1 = arith.constant 1 : index
    %c0_14 = arith.constant 0 : index
    %c0_15 = arith.constant 0 : index
    %13 = vector.load %arg3[%c1, %c0_14, %c0_15] : memref<3x32x32xf32, #tpu.memory_space<vmem>>, vector<1x32x32xf32>
    %14 = vector.shape_cast %13 : vector<1x32x32xf32> to vector<32x32xf32>
    %cst_16 = arith.constant dense<0.000000e+00> : vector<16x32xf32>
    %15 = tpu.matmul %3, %14, %cst_16 {dimension_numbers = #tpu.dot_dimension_numbers<[1], [0], [0], [1], [0, 0, 1, 1], [], []>} : vector<16x32xf32>, vector<32x32xf32>, vector<16x32xf32> -> vector<16x32xf32>
    %c1_17 = arith.constant 1 : index
    %c0_18 = arith.constant 0 : index
    %c0_19 = arith.constant 0 : index
    %16 = vector.load %arg4[%c1_17, %c0_18, %c0_19] : memref<3x1x32xf32, #tpu.memory_space<vmem>>, vector<1x1x32xf32>
    %17 = vector.shape_cast %16 : vector<1x1x32xf32> to vector<1x32xf32>
    %18 = vector.broadcast %17 : vector<1x32xf32> to vector<16x32xf32>
    %19 = arith.addf %15, %18 : vector<16x32xf32>
    %c2 = arith.constant 2 : index
    %c0_20 = arith.constant 0 : index
    %c0_21 = arith.constant 0 : index
    %20 = vector.load %arg3[%c2, %c0_20, %c0_21] : memref<3x32x32xf32, #tpu.memory_space<vmem>>, vector<1x32x32xf32>
    %21 = vector.shape_cast %20 : vector<1x32x32xf32> to vector<32x32xf32>
    %cst_22 = arith.constant dense<0.000000e+00> : vector<16x32xf32>
    %22 = tpu.matmul %5, %21, %cst_22 {dimension_numbers = #tpu.dot_dimension_numbers<[1], [0], [0], [1], [0, 0, 1, 1], [], []>} : vector<16x32xf32>, vector<32x32xf32>, vector<16x32xf32> -> vector<16x32xf32>
    %c2_23 = arith.constant 2 : index
    %c0_24 = arith.constant 0 : index
    %c0_25 = arith.constant 0 : index
    %23 = vector.load %arg4[%c2_23, %c0_24, %c0_25] : memref<3x1x32xf32, #tpu.memory_space<vmem>>, vector<1x1x32xf32>
    %24 = vector.shape_cast %23 : vector<1x1x32xf32> to vector<1x32xf32>
    %25 = vector.broadcast %24 : vector<1x32xf32> to vector<16x32xf32>
    %26 = arith.addf %22, %25 : vector<16x32xf32>
    %27 = vector.extract_strided_slice %12 {offsets = [0, 0], sizes = [16, 8], strides = [1, 1]} : vector<16x32xf32> to vector<16x8xf32>
    %28 = vector.shape_cast %27 : vector<16x8xf32> to vector<2x8x8xf32>
    %29 = vector.extract_strided_slice %12 {offsets = [0, 8], sizes = [16, 8], strides = [1, 1]} : vector<16x32xf32> to vector<16x8xf32>
    %30 = vector.shape_cast %29 : vector<16x8xf32> to vector<2x8x8xf32>
    %31 = vector.extract_strided_slice %12 {offsets = [0, 16], sizes = [16, 8], strides = [1, 1]} : vector<16x32xf32> to vector<16x8xf32>
    %32 = vector.shape_cast %31 : vector<16x8xf32> to vector<2x8x8xf32>
    %33 = vector.extract_strided_slice %12 {offsets = [0, 24], sizes = [16, 8], strides = [1, 1]} : vector<16x32xf32> to vector<16x8xf32>
    %34 = vector.shape_cast %33 : vector<16x8xf32> to vector<2x8x8xf32>
    %35 = tpu.concatenate %28, %30, %32, %34 in 0 : vector<2x8x8xf32>, vector<2x8x8xf32>, vector<2x8x8xf32>, vector<2x8x8xf32> -> vector<8x8x8xf32>
    %36 = vector.extract_strided_slice %19 {offsets = [0, 0], sizes = [16, 8], strides = [1, 1]} : vector<16x32xf32> to vector<16x8xf32>
    %37 = vector.shape_cast %36 : vector<16x8xf32> to vector<2x8x8xf32>
    %38 = vector.extract_strided_slice %19 {offsets = [0, 8], sizes = [16, 8], strides = [1, 1]} : vector<16x32xf32> to vector<16x8xf32>
    %39 = vector.shape_cast %38 : vector<16x8xf32> to vector<2x8x8xf32>
    %40 = vector.extract_strided_slice %19 {offsets = [0, 16], sizes = [16, 8], strides = [1, 1]} : vector<16x32xf32> to vector<16x8xf32>
    %41 = vector.shape_cast %40 : vector<16x8xf32> to vector<2x8x8xf32>
    %42 = vector.extract_strided_slice %19 {offsets = [0, 24], sizes = [16, 8], strides = [1, 1]} : vector<16x32xf32> to vector<16x8xf32>
    %43 = vector.shape_cast %42 : vector<16x8xf32> to vector<2x8x8xf32>
    %44 = tpu.concatenate %37, %39, %41, %43 in 0 : vector<2x8x8xf32>, vector<2x8x8xf32>, vector<2x8x8xf32>, vector<2x8x8xf32> -> vector<8x8x8xf32>
    %45 = vector.extract_strided_slice %26 {offsets = [0, 0], sizes = [16, 8], strides = [1, 1]} : vector<16x32xf32> to vector<16x8xf32>
    %46 = vector.shape_cast %45 : vector<16x8xf32> to vector<2x8x8xf32>
    %47 = vector.extract_strided_slice %26 {offsets = [0, 8], sizes = [16, 8], strides = [1, 1]} : vector<16x32xf32> to vector<16x8xf32>
    %48 = vector.shape_cast %47 : vector<16x8xf32> to vector<2x8x8xf32>
    %49 = vector.extract_strided_slice %26 {offsets = [0, 16], sizes = [16, 8], strides = [1, 1]} : vector<16x32xf32> to vector<16x8xf32>
    %50 = vector.shape_cast %49 : vector<16x8xf32> to vector<2x8x8xf32>
    %51 = vector.extract_strided_slice %26 {offsets = [0, 24], sizes = [16, 8], strides = [1, 1]} : vector<16x32xf32> to vector<16x8xf32>
    %52 = vector.shape_cast %51 : vector<16x8xf32> to vector<2x8x8xf32>
    %53 = tpu.concatenate %46, %48, %50, %52 in 0 : vector<2x8x8xf32>, vector<2x8x8xf32>, vector<2x8x8xf32>, vector<2x8x8xf32> -> vector<8x8x8xf32>
    "tpu.trace_start"() <{level = 10 : i32, message = "zqd,zkd->zqk"}> : () -> ()
    %cst_26 = arith.constant dense<0.000000e+00> : vector<8x8x8xf32>
    %54 = tpu.matmul %35, %44, %cst_26 {dimension_numbers = #tpu.dot_dimension_numbers<[2], [2], [1], [1], [0, 0, 0, 1, 1, 1], [0], [0]>} : vector<8x8x8xf32>, vector<8x8x8xf32>, vector<8x8x8xf32> -> vector<8x8x8xf32>
    "tpu.trace_stop"() : () -> ()
    %cst_27 = arith.constant 0.353553385 : f32
    %55 = vector.broadcast %cst_27 : f32 to vector<8x8x8xf32>
    %56 = arith.mulf %54, %55 : vector<8x8x8xf32>
    %cst_28 = arith.constant dense<0xFF800000> : vector<8x8xf32>
    %57 = vector.multi_reduction <maximumf>, %56, %cst_28 [2] : vector<8x8x8xf32> to vector<8x8xf32>
    %58 = vector.shape_cast %57 : vector<8x8xf32> to vector<8x8x1xf32>
    %59 = vector.broadcast %58 : vector<8x8x1xf32> to vector<8x8x8xf32>
    %60 = arith.subf %56, %59 : vector<8x8x8xf32>
    %61 = math.exp %60 : vector<8x8x8xf32>
    %cst_29 = arith.constant dense<0.000000e+00> : vector<8x8xf32>
    %62 = vector.multi_reduction <add>, %61, %cst_29 [2] : vector<8x8x8xf32> to vector<8x8xf32>
    %63 = vector.shape_cast %62 : vector<8x8xf32> to vector<8x8x1xf32>
    %64 = vector.broadcast %63 : vector<8x8x1xf32> to vector<8x8x8xf32>
    %65 = arith.divf %61, %64 : vector<8x8x8xf32>
    "tpu.trace_start"() <{level = 10 : i32, message = "zqk,zkd->zqd"}> : () -> ()
    %cst_30 = arith.constant dense<0.000000e+00> : vector<8x8x8xf32>
    %66 = tpu.matmul %65, %53, %cst_30 {dimension_numbers = #tpu.dot_dimension_numbers<[2], [1], [1], [2], [0, 0, 0, 1, 1, 2], [0], [0]>} : vector<8x8x8xf32>, vector<8x8x8xf32>, vector<8x8x8xf32> -> vector<8x8x8xf32>
    "tpu.trace_stop"() : () -> ()
    %67 = vector.extract_strided_slice %66 {offsets = [0, 0, 0], sizes = [2, 8, 8], strides = [1, 1, 1]} : vector<8x8x8xf32> to vector<2x8x8xf32>
    %68 = vector.shape_cast %67 : vector<2x8x8xf32> to vector<16x8xf32>
    %69 = vector.extract_strided_slice %66 {offsets = [2, 0, 0], sizes = [2, 8, 8], strides = [1, 1, 1]} : vector<8x8x8xf32> to vector<2x8x8xf32>
    %70 = vector.shape_cast %69 : vector<2x8x8xf32> to vector<16x8xf32>
    %71 = vector.extract_strided_slice %66 {offsets = [4, 0, 0], sizes = [2, 8, 8], strides = [1, 1, 1]} : vector<8x8x8xf32> to vector<2x8x8xf32>
    %72 = vector.shape_cast %71 : vector<2x8x8xf32> to vector<16x8xf32>
    %73 = vector.extract_strided_slice %66 {offsets = [6, 0, 0], sizes = [2, 8, 8], strides = [1, 1, 1]} : vector<8x8x8xf32> to vector<2x8x8xf32>
    %74 = vector.shape_cast %73 : vector<2x8x8xf32> to vector<16x8xf32>
    %75 = tpu.concatenate %68, %70, %72, %74 in 1 : vector<16x8xf32>, vector<16x8xf32>, vector<16x8xf32>, vector<16x8xf32> -> vector<16x32xf32>
    %c0_31 = arith.constant 0 : index
    %c0_32 = arith.constant 0 : index
    %76 = vector.load %arg5[%c0_31, %c0_32] : memref<32x32xf32, #tpu.memory_space<vmem>>, vector<32x32xf32>
    %cst_33 = arith.constant dense<0.000000e+00> : vector<16x32xf32>
    %77 = tpu.matmul %75, %76, %cst_33 {dimension_numbers = #tpu.dot_dimension_numbers<[1], [0], [0], [1], [0, 0, 1, 1], [], []>} : vector<16x32xf32>, vector<32x32xf32>, vector<16x32xf32> -> vector<16x32xf32>
    %c0_34 = arith.constant 0 : index
    %c0_35 = arith.constant 0 : index
    %78 = vector.load %arg6[%c0_34, %c0_35] : memref<1x32xf32, #tpu.memory_space<vmem>>, vector<1x32xf32>
    %79 = vector.broadcast %78 : vector<1x32xf32> to vector<16x32xf32>
    %80 = arith.addf %77, %79 : vector<16x32xf32>
    %c0_36 = arith.constant 0 : index
    %c0_37 = arith.constant 0 : index
    %81 = vector.load %arg7[%c0_36, %c0_37] : memref<16x32xf32, #tpu.memory_space<vmem>>, vector<16x32xf32>
    tpu.vector_store %arg7[%c0_36, %c0_37], %80 {strides = array<i32>} : memref<16x32xf32, #tpu.memory_space<vmem>>, vector<16x32xf32>,
    return
  }
}

</mosaic_0001>

<llo_original>
// kernel: tpu_custom_call.1
$region0: #{tpu_custom_call.1}
  #allocation0 [shape = 'u32[]', space=smem, size = 0x4, offset = 0x4, fixed_abs, tag = 'smem constant byte address 0x4 - core index']
  #allocation1 [shape = 'u32[144,128]{1,0:T(1,128)}', space=vmem, size = 0x12000, scoped, tag = 'internal scratch']
  %s0 = inlined_call_operand.hbm [shape: f32[2,8,32], index: 0, kind: input, shape index: {}]
  %s1 = inlined_call_operand.hbm [shape: f32[2,8,32], index: 1, kind: input, shape index: {}]
  %s2 = inlined_call_operand.hbm [shape: f32[2,8,32], index: 2, kind: input, shape index: {}]
  %s3 = inlined_call_operand.hbm [shape: f32[3,32,32], index: 3, kind: input, shape index: {}]
  %s4 = inlined_call_operand.vmem [shape: f32[3,1,32], index: 4, kind: input, shape index: {}]
  %s5 = inlined_call_operand.hbm [shape: f32[32,32], index: 5, kind: input, shape index: {}]
  %s6 = inlined_call_operand.vmem [shape: f32[1,32], index: 6, kind: input, shape index: {}]
  %s7 = inlined_call_operand.hbm [shape: f32[16,32], index: 7, kind: output, shape index: {}]
  %s8 = sld [smem:[#allocation0]]
  $region58: #{tpu_custom_call.1} parent=0
    _
  %s10 = ssub.s32 1, %s8
  %s11 = scalar_select 0, %s10, %s8
  $region1: #{tpu_custom_call.1} parent=0
    #allocation2 [shape = 'u8[8192]{0}', space=vmem, size = 0x2000, scoped, tag = 'input window, operand 0, single buffered']
    #allocation3 [shape = 's32[1]{0}', space=sflag, size = 0x4, scoped, tag = 'scoped memory for tpu_custom_call.1']
    #allocation4 [shape = 's32[1]{0}', space=sflag, size = 0x4, scoped, tag = 'scoped memory for tpu_custom_call.1']
    #allocation5 [shape = 'u8[8192]{0}', space=vmem, size = 0x2000, scoped, tag = 'input window, operand 1, single buffered']
    #allocation6 [shape = 's32[1]{0}', space=sflag, size = 0x4, scoped, tag = 'scoped memory for tpu_custom_call.1']
    #allocation7 [shape = 'u8[8192]{0}', space=vmem, size = 0x2000, scoped, tag = 'input window, operand 2, single buffered']
    #allocation8 [shape = 'u8[49152]{0}', space=vmem, size = 0xc000, scoped, tag = 'input window, operand 3, single buffered']
    #allocation9 [shape = 's32[1]{0}', space=sflag, size = 0x4, scoped, tag = 'scoped memory for tpu_custom_call.1']
    #allocation10 [shape = 'u8[16384]{0}', space=vmem, size = 0x4000, scoped, tag = 'input window, operand 5, single buffered']
    #allocation11 [shape = 'u8[8192]{0}', space=vmem, size = 0x2000, scoped, tag = 'output window, operand 0, single buffered']
    %12 = vsyncpa [#allocation3], 0
    %13 = vsyncpa [#allocation6], 0
    %14 = vsyncpa [#allocation9], 0
    %15 = vsyncpa [#allocation4], 0
    // Predicated region
    $region2: #{tpu_custom_call.1} parent=1 // pred_check
      _
    $region3: #{tpu_custom_call.1} parent=1 // pred_check_branch
      %17 = sbr.rel (0) target = $region5
    $region4: #{tpu_custom_call.1} parent=1 // pred_region
      %s19 = ssub.s32 256, 256
      %20 = vsyncadd [#allocation3], %s19
      %s21 = sshll.u32 [#allocation2], 4
      %s22 = int_to_ptr.vmem [resolvable:$true] %s21
      %27 = dma.hbm_to_vmem [thread:$0]  %s0, 256, %s22, [#allocation3], 128, 128, 8
    $region5: #{tpu_custom_call.1} parent=1 // pred_fallthru
      _
    // Predicated region
    $region6: #{tpu_custom_call.1} parent=1 // pred_check
      _
    $region7: #{tpu_custom_call.1} parent=1 // pred_check_branch
      %29 = sbr.rel (0) target = $region9
    $region8: #{tpu_custom_call.1} parent=1 // pred_region
      %s31 = ssub.s32 256, 256
      %32 = vsyncadd [#allocation6], %s31
      %s33 = sshll.u32 [#allocation5], 4
      %s34 = int_to_ptr.vmem [resolvable:$true] %s33
      %39 = dma.hbm_to_vmem [thread:$0]  %s1, 256, %s34, [#allocation6], 128, 128, 8
    $region9: #{tpu_custom_call.1} parent=1 // pred_fallthru
      _
    // Predicated region
    $region10: #{tpu_custom_call.1} parent=1 // pred_check
      _
    $region11: #{tpu_custom_call.1} parent=1 // pred_check_branch
      %41 = sbr.rel (0) target = $region13
    $region12: #{tpu_custom_call.1} parent=1 // pred_region
      %s43 = ssub.s32 256, 256
      %44 = vsyncadd [#allocation6], %s43
      %s45 = sshll.u32 [#allocation7], 4
      %s46 = int_to_ptr.vmem [resolvable:$true] %s45
      %51 = dma.hbm_to_vmem [thread:$0]  %s2, 256, %s46, [#allocation6], 128, 128, 8
    $region13: #{tpu_custom_call.1} parent=1 // pred_fallthru
      _
    // Predicated region
    $region14: #{tpu_custom_call.1} parent=1 // pred_check
      _
    $region15: #{tpu_custom_call.1} parent=1 // pred_check_branch
      %53 = sbr.rel (0) target = $region17
    $region16: #{tpu_custom_call.1} parent=1 // pred_region
      %s55 = ssub.s32 1536, 1536
      %56 = vsyncadd [#allocation9], %s55
      %s57 = sshll.u32 [#allocation8], 4
      %s58 = int_to_ptr.vmem [resolvable:$true] %s57
      %63 = dma.hbm_to_vmem [thread:$0]  %s3, 1536, %s58, [#allocation9], 128, 128, 8
    $region17: #{tpu_custom_call.1} parent=1 // pred_fallthru
      _
    // Predicated region
    $region18: #{tpu_custom_call.1} parent=1 // pred_check
      _
    $region19: #{tpu_custom_call.1} parent=1 // pred_check_branch
      %65 = sbr.rel (0) target = $region21
    $region20: #{tpu_custom_call.1} parent=1 // pred_region
      _
    $region21: #{tpu_custom_call.1} parent=1 // pred_fallthru
      _
    // Predicated region
    $region22: #{tpu_custom_call.1} parent=1 // pred_check
      _
    $region23: #{tpu_custom_call.1} parent=1 // pred_check_branch
      %67 = sbr.rel (0) target = $region25
    $region24: #{tpu_custom_call.1} parent=1 // pred_region
      %s69 = ssub.s32 512, 512
      %70 = vsyncadd [#allocation9], %s69
      %s71 = sshll.u32 [#allocation10], 4
      %s72 = int_to_ptr.vmem [resolvable:$true] %s71
      %77 = dma.hbm_to_vmem [thread:$0]  %s5, 512, %s72, [#allocation9], 128, 128, 8
    $region25: #{tpu_custom_call.1} parent=1 // pred_fallthru
      _
    // Predicated region
    $region26: #{tpu_custom_call.1} parent=1 // pred_check
      _
    $region27: #{tpu_custom_call.1} parent=1 // pred_check_branch
      %79 = sbr.rel (0) target = $region29
    $region28: #{tpu_custom_call.1} parent=1 // pred_region
      _
    $region29: #{tpu_custom_call.1} parent=1 // pred_fallthru
      _
    // Predicated region
    $region30: #{tpu_custom_call.1} parent=1 // pred_check
      _
    $region31: #{tpu_custom_call.1} parent=1 // pred_check_branch
      %81 = sbr.rel (0) target = $region33
    $region32: #{tpu_custom_call.1} parent=1 // pred_region
      %82 = dma.done [#allocation3], 256
    $region33: #{tpu_custom_call.1} parent=1 // pred_fallthru
      _
    // Predicated region
    $region34: #{tpu_custom_call.1} parent=1 // pred_check
      _
    $region35: #{tpu_custom_call.1} parent=1 // pred_check_branch
      %84 = sbr.rel (0) target = $region37
    $region36: #{tpu_custom_call.1} parent=1 // pred_region
      %85 = dma.done [#allocation6], 256
    $region37: #{tpu_custom_call.1} parent=1 // pred_fallthru
      _
    // Predicated region
    $region38: #{tpu_custom_call.1} parent=1 // pred_check
      _
    $region39: #{tpu_custom_call.1} parent=1 // pred_check_branch
      %87 = sbr.rel (0) target = $region41
    $region40: #{tpu_custom_call.1} parent=1 // pred_region
      %88 = dma.done [#allocation6], 256
    $region41: #{tpu_custom_call.1} parent=1 // pred_fallthru
      _
    // Predicated region
    $region42: #{tpu_custom_call.1} parent=1 // pred_check
      _
    $region43: #{tpu_custom_call.1} parent=1 // pred_check_branch
      %90 = sbr.rel (0) target = $region45
    $region44: #{tpu_custom_call.1} parent=1 // pred_region
      %91 = dma.done [#allocation9], 1536
    $region45: #{tpu_custom_call.1} parent=1 // pred_fallthru
      _
    // Predicated region
    $region46: #{tpu_custom_call.1} parent=1 // pred_check
      _
    $region47: #{tpu_custom_call.1} parent=1 // pred_check_branch
      %93 = sbr.rel (0) target = $region49
    $region48: #{tpu_custom_call.1} parent=1 // pred_region
      %94 = dma.done [#allocation9], 512
    $region49: #{tpu_custom_call.1} parent=1 // pred_fallthru
      _
    %v95 = vld [vmem:[#allocation2] sm:$0xff]
    %v96 = vld [vmem:[#allocation2 + $0x8] sm:$0xff]
    %v97 = vld [vmem:[#allocation5] sm:$0xff]
    %v98 = vld [vmem:[#allocation5 + $0x8] sm:$0xff]
    %v99 = vld [vmem:[#allocation7] sm:$0xff]
    %v100 = vld [vmem:[#allocation7 + $0x8] sm:$0xff]
    %v101 = vld [vmem:[#allocation8] sm:$0xff]
    %v102 = vld [vmem:[#allocation8 + $0x8] sm:$0xff]
    %v103 = vld [vmem:[#allocation8 + $0x10] sm:$0xff]
    %v104 = vld [vmem:[#allocation8 + $0x18] sm:$0xff]
    %v105 = vld [vmem:[%s4] sm:$0x1]
    %v107 = vlaneseq
    %v108 = vshrl.u32 %v107, 7
    %v109 = vsub.s32 0, %v108
    %v110 = vrot.slane %v105, %v109
    %vm112 = vcmask 261120
    %v114 = vsel %vm112, %v95, 0
    %v117 = vsel %vm112, %v96, 0
    %119 = vmatprep.subr.mxu0 0.0
    %120 = vmatpush1.msra.mxu0 %v101
    %121 = vmatprep.subr.mxu0 0.0
    %122 = vmatpush1.msra.mxu0 %v102
    %123 = vmatprep.subr.mxu0 0.0
    %124 = vmatpush1.msra.mxu0 %v103
    %125 = vmatprep.subr.mxu0 0.0
    %126 = vmatpush1.msra.mxu0 %v104
    %127 = vmatprep.subr.mxu0 0.0
    %128 = vmatpush1.msra.mxu0 0.0
    %129 = vmatprep.subr.mxu0 0.0
    %130 = vmatpush1.msra.mxu0 0.0
    %131 = vmatprep.subr.mxu0 0.0
    %132 = vmatpush1.msra.mxu0 0.0
    %133 = vmatprep.subr.mxu0 0.0
    %134 = vmatpush1.msra.mxu0 0.0
    %135 = vmatprep.subr.mxu0 0.0
    %136 = vmatpush1.msra.mxu0 0.0
    %137 = vmatprep.subr.mxu0 0.0
    %138 = vmatpush1.msra.mxu0 0.0
    %139 = vmatprep.subr.mxu0 0.0
    %140 = vmatpush1.msra.mxu0 0.0
    %141 = vmatprep.subr.mxu0 0.0
    %142 = vmatpush1.msra.mxu0 0.0
    %143 = vmatprep.subr.mxu0 0.0
    %144 = vmatpush1.msra.mxu0 0.0
    %145 = vmatprep.subr.mxu0 0.0
    %146 = vmatpush1.msra.mxu0 0.0
    %147 = vmatprep.subr.mxu0 0.0
    %148 = vmatpush1.msra.mxu0 0.0
    %149 = vmatprep.subr.mxu0 0.0
    %150 = vmatpush1.msra.mxu0 0.0
    %151 = vmatprep.subr.mxu0 0.0
    %152 = vmatpush1.msra.mxu0 0.0
    %153 = vmatprep.subr.mxu0 0.0
    %154 = vmatpush1.msra.mxu0 0.0
    %155 = vmatprep.subr.mxu0 0.0
    %156 = vmatpush1.msra.mxu0 0.0
    %157 = vmatprep.subr.mxu0 0.0
    %158 = vmatpush1.msra.mxu0 0.0
    %159 = vmatprep.subr.mxu0 0.0
    %160 = vmatpush1.msra.mxu0 0.0
    %161 = vmatprep.subr.mxu0 0.0
    %162 = vmatpush1.msra.mxu0 0.0
    %163 = vmatprep.subr.mxu0 0.0
    %164 = vmatpush1.msra.mxu0 0.0
    %165 = vmatprep.subr.mxu0 0.0
    %166 = vmatpush1.msra.mxu0 0.0
    %167 = vmatprep.subr.mxu0 0.0
    %168 = vmatpush1.msra.mxu0 0.0
    %169 = vmatprep.subr.mxu0 0.0
    %170 = vmatpush1.msra.mxu0 0.0
    %171 = vmatprep.subr.mxu0 0.0
    %172 = vmatpush1.msra.mxu0 0.0
    %173 = vmatprep.subr.mxu0 0.0
    %174 = vmatpush1.msra.mxu0 0.0
    %175 = vmatprep.subr.mxu0 0.0
    %176 = vmatpush1.msra.mxu0 0.0
    %177 = vmatprep.subr.mxu0 0.0
    %178 = vmatpush1.msra.mxu0 0.0
    %179 = vmatprep.subr.mxu0 0.0
    %180 = vmatpush1.msra.mxu0 0.0
    %181 = vmatprep.subr.mxu0 0.0
    %182 = vmatpush1.msra.mxu0 0.0
    %183 = vmatprep.mubr.f32.mxu0 0.0
    %184 = vmatmul.mubr.f32.gmra.mrb[0].mxu0 %v114
    %v185 = vpop.f32.mrb[0].mxu0
    %v186 = vadd.f32 %v110, %v185
    %v187 = vpop.f32.mrb[0].mxu0
    %188 = vmatprep.mubr.f32.mxu0 0.0
    %189 = vmatmul.mubr.f32.gmra.mrb[0].mxu0 %v117
    %v190 = vpop.f32.mrb[0].mxu0
    %v191 = vadd.f32 %v110, %v190
    %v192 = vpop.f32.mrb[0].mxu0
    %193 = vdwg.mxu0
    %s194 = scalar_lea.vmem [#allocation8], 32
    %v195 = vld [vmem:[%s194] sm:$0xff]
    %v196 = vld [vmem:[%s194 + $0x8] sm:$0xff]
    %v197 = vld [vmem:[%s194 + $0x10] sm:$0xff]
    %v198 = vld [vmem:[%s194 + $0x18] sm:$0xff]
    %s199 = scalar_lea.vmem %s4, 1
    %v200 = vld [vmem:[%s199] sm:$0x1]
    %v202 = vlaneseq
    %v203 = vshrl.u32 %v202, 7
    %v204 = vsub.s32 0, %v203
    %v205 = vrot.slane %v200, %v204
    %v208 = vsel %vm112, %v97, 0
    %v211 = vsel %vm112, %v98, 0
    %213 = vmatprep.subr.mxu0 0.0
    %214 = vmatpush1.msra.mxu0 %v195
    %215 = vmatprep.subr.mxu0 0.0
    %216 = vmatpush1.msra.mxu0 %v196
    %217 = vmatprep.subr.mxu0 0.0
    %218 = vmatpush1.msra.mxu0 %v197
    %219 = vmatprep.subr.mxu0 0.0
    %220 = vmatpush1.msra.mxu0 %v198
    %221 = vmatprep.subr.mxu0 0.0
    %222 = vmatpush1.msra.mxu0 0.0
    %223 = vmatprep.subr.mxu0 0.0
    %224 = vmatpush1.msra.mxu0 0.0
    %225 = vmatprep.subr.mxu0 0.0
    %226 = vmatpush1.msra.mxu0 0.0
    %227 = vmatprep.subr.mxu0 0.0
    %228 = vmatpush1.msra.mxu0 0.0
    %229 = vmatprep.subr.mxu0 0.0
    %230 = vmatpush1.msra.mxu0 0.0
    %231 = vmatprep.subr.mxu0 0.0
    %232 = vmatpush1.msra.mxu0 0.0
    %233 = vmatprep.subr.mxu0 0.0
    %234 = vmatpush1.msra.mxu0 0.0
    %235 = vmatprep.subr.mxu0 0.0
    %236 = vmatpush1.msra.mxu0 0.0
    %237 = vmatprep.subr.mxu0 0.0
    %238 = vmatpush1.msra.mxu0 0.0
    %239 = vmatprep.subr.mxu0 0.0
    %240 = vmatpush1.msra.mxu0 0.0
    %241 = vmatprep.subr.mxu0 0.0
    %242 = vmatpush1.msra.mxu0 0.0
    %243 = vmatprep.subr.mxu0 0.0
    %244 = vmatpush1.msra.mxu0 0.0
    %245 = vmatprep.subr.mxu0 0.0
    %246 = vmatpush1.msra.mxu0 0.0
    %247 = vmatprep.subr.mxu0 0.0
    %248 = vmatpush1.msra.mxu0 0.0
    %249 = vmatprep.subr.mxu0 0.0
    %250 = vmatpush1.msra.mxu0 0.0
    %251 = vmatprep.subr.mxu0 0.0
    %252 = vmatpush1.msra.mxu0 0.0
    %253 = vmatprep.subr.mxu0 0.0
    %254 = vmatpush1.msra.mxu0 0.0
    %255 = vmatprep.subr.mxu0 0.0
    %256 = vmatpush1.msra.mxu0 0.0
    %257 = vmatprep.subr.mxu0 0.0
    %258 = vmatpush1.msra.mxu0 0.0
    %259 = vmatprep.subr.mxu0 0.0
    %260 = vmatpush1.msra.mxu0 0.0
    %261 = vmatprep.subr.mxu0 0.0
    %262 = vmatpush1.msra.mxu0 0.0
    %263 = vmatprep.subr.mxu0 0.0
    %264 = vmatpush1.msra.mxu0 0.0
    %265 = vmatprep.subr.mxu0 0.0
    %266 = vmatpush1.msra.mxu0 0.0
    %267 = vmatprep.subr.mxu0 0.0
    %268 = vmatpush1.msra.mxu0 0.0
    %269 = vmatprep.subr.mxu0 0.0
    %270 = vmatpush1.msra.mxu0 0.0
    %271 = vmatprep.subr.mxu0 0.0
    %272 = vmatpush1.msra.mxu0 0.0
    %273 = vmatprep.subr.mxu0 0.0
    %274 = vmatpush1.msra.mxu0 0.0
    %275 = vmatprep.subr.mxu0 0.0
    %276 = vmatpush1.msra.mxu0 0.0
    %277 = vmatprep.mubr.f32.mxu0 0.0
    %278 = vmatmul.mubr.f32.gmra.mrb[0].mxu0 %v208
    %v279 = vpop.f32.mrb[0].mxu0
    %v280 = vadd.f32 %v205, %v279
    %v281 = vpop.f32.mrb[0].mxu0
    %282 = vmatprep.mubr.f32.mxu0 0.0
    %283 = vmatmul.mubr.f32.gmra.mrb[0].mxu0 %v211
    %v284 = vpop.f32.mrb[0].mxu0
    %v285 = vadd.f32 %v205, %v284
    %v286 = vpop.f32.mrb[0].mxu0
    %287 = vdwg.mxu0
    %s288 = scalar_lea.vmem [#allocation8], 64
    %v289 = vld [vmem:[%s288] sm:$0xff]
    %v290 = vld [vmem:[%s288 + $0x8] sm:$0xff]
    %v291 = vld [vmem:[%s288 + $0x10] sm:$0xff]
    %v292 = vld [vmem:[%s288 + $0x18] sm:$0xff]
    %s293 = scalar_lea.vmem %s4, 2
    %v294 = vld [vmem:[%s293] sm:$0x1]
    %v296 = vlaneseq
    %v297 = vshrl.u32 %v296, 7
    %v298 = vsub.s32 0, %v297
    %v299 = vrot.slane %v294, %v298
    %v302 = vsel %vm112, %v99, 0
    %v305 = vsel %vm112, %v100, 0
    %307 = vmatprep.subr.mxu0 0.0
    %308 = vmatpush1.msra.mxu0 %v289
    %309 = vmatprep.subr.mxu0 0.0
    %310 = vmatpush1.msra.mxu0 %v290
    %311 = vmatprep.subr.mxu0 0.0
    %312 = vmatpush1.msra.mxu0 %v291
    %313 = vmatprep.subr.mxu0 0.0
    %314 = vmatpush1.msra.mxu0 %v292
    %315 = vmatprep.subr.mxu0 0.0
    %316 = vmatpush1.msra.mxu0 0.0
    %317 = vmatprep.subr.mxu0 0.0
    %318 = vmatpush1.msra.mxu0 0.0
    %319 = vmatprep.subr.mxu0 0.0
    %320 = vmatpush1.msra.mxu0 0.0
    %321 = vmatprep.subr.mxu0 0.0
    %322 = vmatpush1.msra.mxu0 0.0
    %323 = vmatprep.subr.mxu0 0.0
    %324 = vmatpush1.msra.mxu0 0.0
    %325 = vmatprep.subr.mxu0 0.0
    %326 = vmatpush1.msra.mxu0 0.0
    %327 = vmatprep.subr.mxu0 0.0
    %328 = vmatpush1.msra.mxu0 0.0
    %329 = vmatprep.subr.mxu0 0.0
    %330 = vmatpush1.msra.mxu0 0.0
    %331 = vmatprep.subr.mxu0 0.0
    %332 = vmatpush1.msra.mxu0 0.0
    %333 = vmatprep.subr.mxu0 0.0
    %334 = vmatpush1.msra.mxu0 0.0
    %335 = vmatprep.subr.mxu0 0.0
    %336 = vmatpush1.msra.mxu0 0.0
    %337 = vmatprep.subr.mxu0 0.0
    %338 = vmatpush1.msra.mxu0 0.0
    %339 = vmatprep.subr.mxu0 0.0
    %340 = vmatpush1.msra.mxu0 0.0
    %341 = vmatprep.subr.mxu0 0.0
    %342 = vmatpush1.msra.mxu0 0.0
    %343 = vmatprep.subr.mxu0 0.0
    %344 = vmatpush1.msra.mxu0 0.0
    %345 = vmatprep.subr.mxu0 0.0
    %346 = vmatpush1.msra.mxu0 0.0
    %347 = vmatprep.subr.mxu0 0.0
    %348 = vmatpush1.msra.mxu0 0.0
    %349 = vmatprep.subr.mxu0 0.0
    %350 = vmatpush1.msra.mxu0 0.0
    %351 = vmatprep.subr.mxu0 0.0
    %352 = vmatpush1.msra.mxu0 0.0
    %353 = vmatprep.subr.mxu0 0.0
    %354 = vmatpush1.msra.mxu0 0.0
    %355 = vmatprep.subr.mxu0 0.0
    %356 = vmatpush1.msra.mxu0 0.0
    %357 = vmatprep.subr.mxu0 0.0
    %358 = vmatpush1.msra.mxu0 0.0
    %359 = vmatprep.subr.mxu0 0.0
    %360 = vmatpush1.msra.mxu0 0.0
    %361 = vmatprep.subr.mxu0 0.0
    %362 = vmatpush1.msra.mxu0 0.0
    %363 = vmatprep.subr.mxu0 0.0
    %364 = vmatpush1.msra.mxu0 0.0
    %365 = vmatprep.subr.mxu0 0.0
    %366 = vmatpush1.msra.mxu0 0.0
    %367 = vmatprep.subr.mxu0 0.0
    %368 = vmatpush1.msra.mxu0 0.0
    %369 = vmatprep.subr.mxu0 0.0
    %370 = vmatpush1.msra.mxu0 0.0
    %371 = vmatprep.mubr.f32.mxu0 0.0
    %372 = vmatmul.mubr.f32.gmra.mrb[0].mxu0 %v302
    %v373 = vpop.f32.mrb[0].mxu0
    %v374 = vadd.f32 %v299, %v373
    %v375 = vpop.f32.mrb[0].mxu0
    %376 = vmatprep.mubr.f32.mxu0 0.0
    %377 = vmatmul.mubr.f32.gmra.mrb[0].mxu0 %v305
    %v378 = vpop.f32.mrb[0].mxu0
    %v379 = vadd.f32 %v299, %v378
    %v380 = vpop.f32.mrb[0].mxu0
    %381 = vdwg.mxu0
    %384 = vrot.lane.b32.xlu0 %v186, 120
    %v385 = vpop.permute.xlu0 %384
    %386 = vrot.lane.b32.xlu0 %v191, 120
    %v387 = vpop.permute.xlu0 %386
    %388 = vrot.lane.b32.xlu0 %v186, 112
    %v389 = vpop.permute.xlu0 %388
    %390 = vrot.lane.b32.xlu0 %v191, 112
    %v391 = vpop.permute.xlu0 %390
    %392 = vrot.lane.b32.xlu0 %v186, 104
    %v393 = vpop.permute.xlu0 %392
    %394 = vrot.lane.b32.xlu0 %v191, 104
    %v395 = vpop.permute.xlu0 %394
    %398 = vrot.lane.b32.xlu0 %v280, 120
    %v399 = vpop.permute.xlu0 %398
    %400 = vrot.lane.b32.xlu0 %v285, 120
    %v401 = vpop.permute.xlu0 %400
    %402 = vrot.lane.b32.xlu0 %v280, 112
    %v403 = vpop.permute.xlu0 %402
    %404 = vrot.lane.b32.xlu0 %v285, 112
    %v405 = vpop.permute.xlu0 %404
    %406 = vrot.lane.b32.xlu0 %v280, 104
    %v407 = vpop.permute.xlu0 %406
    %408 = vrot.lane.b32.xlu0 %v285, 104
    %v409 = vpop.permute.xlu0 %408
    %412 = vrot.lane.b32.xlu0 %v374, 120
    %v413 = vpop.permute.xlu0 %412
    %414 = vrot.lane.b32.xlu0 %v379, 120
    %v415 = vpop.permute.xlu0 %414
    %418 = vrot.lane.b32.xlu0 %v374, 112
    %v419 = vpop.permute.xlu0 %418
    %420 = vrot.lane.b32.xlu0 %v379, 112
    %v421 = vpop.permute.xlu0 %420
    %424 = vrot.lane.b32.xlu0 %v374, 104
    %v425 = vpop.permute.xlu0 %424
    %426 = vrot.lane.b32.xlu0 %v379, 104
    %v427 = vpop.permute.xlu0 %426
    %vm430 = vcmask 64512
    %v431 = vsel %vm430, %v186, 0
    %v433 = vsel %vm430, %v280, 0
    %435 = vmatprep.subr.mxu0 0.0
    %436 = vmatpush1.xpose.msra.mxu0 %v433
    %437 = vmatprep.subr.mxu0 0.0
    %438 = vmatpush1.xpose.msra.mxu0 0.0
    %439 = vmatprep.subr.mxu0 0.0
    %440 = vmatpush1.xpose.msra.mxu0 0.0
    %441 = vmatprep.subr.mxu0 0.0
    %442 = vmatpush1.xpose.msra.mxu0 0.0
    %443 = vmatprep.subr.mxu0 0.0
    %444 = vmatpush1.xpose.msra.mxu0 0.0
    %445 = vmatprep.subr.mxu0 0.0
    %446 = vmatpush1.xpose.msra.mxu0 0.0
    %447 = vmatprep.subr.mxu0 0.0
    %448 = vmatpush1.xpose.msra.mxu0 0.0
    %449 = vmatprep.subr.mxu0 0.0
    %450 = vmatpush1.xpose.msra.mxu0 0.0
    %451 = vmatprep.subr.mxu0 0.0
    %452 = vmatpush1.xpose.msra.mxu0 0.0
    %453 = vmatprep.subr.mxu0 0.0
    %454 = vmatpush1.xpose.msra.mxu0 0.0
    %455 = vmatprep.subr.mxu0 0.0
    %456 = vmatpush1.xpose.msra.mxu0 0.0
    %457 = vmatprep.subr.mxu0 0.0
    %458 = vmatpush1.xpose.msra.mxu0 0.0
    %459 = vmatprep.subr.mxu0 0.0
    %460 = vmatpush1.xpose.msra.mxu0 0.0
    %461 = vmatprep.subr.mxu0 0.0
    %462 = vmatpush1.xpose.msra.mxu0 0.0
    %463 = vmatprep.subr.mxu0 0.0
    %464 = vmatpush1.xpose.msra.mxu0 0.0
    %465 = vmatprep.subr.mxu0 0.0
    %466 = vmatpush1.xpose.msra.mxu0 0.0
    %467 = vmatprep.subr.mxu0 0.0
    %468 = vmatpush1.xpose.msra.mxu0 0.0
    %469 = vmatprep.subr.mxu0 0.0
    %470 = vmatpush1.xpose.msra.mxu0 0.0
    %471 = vmatprep.subr.mxu0 0.0
    %472 = vmatpush1.xpose.msra.mxu0 0.0
    %473 = vmatprep.subr.mxu0 0.0
    %474 = vmatpush1.xpose.msra.mxu0 0.0
    %475 = vmatprep.subr.mxu0 0.0
    %476 = vmatpush1.xpose.msra.mxu0 0.0
    %477 = vmatprep.subr.mxu0 0.0
    %478 = vmatpush1.xpose.msra.mxu0 0.0
    %479 = vmatprep.subr.mxu0 0.0
    %480 = vmatpush1.xpose.msra.mxu0 0.0
    %481 = vmatprep.subr.mxu0 0.0
    %482 = vmatpush1.xpose.msra.mxu0 0.0
    %483 = vmatprep.subr.mxu0 0.0
    %484 = vmatpush1.xpose.msra.mxu0 0.0
    %485 = vmatprep.subr.mxu0 0.0
    %486 = vmatpush1.xpose.msra.mxu0 0.0
    %487 = vmatprep.subr.mxu0 0.0
    %488 = vmatpush1.xpose.msra.mxu0 0.0
    %489 = vmatprep.subr.mxu0 0.0
    %490 = vmatpush1.xpose.msra.mxu0 0.0
    %491 = vmatprep.subr.mxu0 0.0
    %492 = vmatpush1.xpose.msra.mxu0 0.0
    %493 = vmatprep.subr.mxu0 0.0
    %494 = vmatpush1.xpose.msra.mxu0 0.0
    %495 = vmatprep.subr.mxu0 0.0
    %496 = vmatpush1.xpose.msra.mxu0 0.0
    %497 = vmatprep.subr.mxu0 0.0
    %498 = vmatpush1.xpose.msra.mxu0 0.0
    %499 = vmatprep.mubr.f32.mxu0 0.0
    %500 = vmatmul.mubr.f32.gmra.mrb[0].mxu0 %v431
    %v501 = vpop.f32.mrb[0].mxu0
    %v502 = vadd.f32 0.0, %v501
    %v503 = vpop.f32.mrb[0].mxu0
    %504 = vdwg.mxu0
    %v505 = vsel %vm430, %v191, 0
    %v507 = vsel %vm430, %v285, 0
    %509 = vmatprep.subr.mxu0 0.0
    %510 = vmatpush1.xpose.msra.mxu0 %v507
    %511 = vmatprep.subr.mxu0 0.0
    %512 = vmatpush1.xpose.msra.mxu0 0.0
    %513 = vmatprep.subr.mxu0 0.0
    %514 = vmatpush1.xpose.msra.mxu0 0.0
    %515 = vmatprep.subr.mxu0 0.0
    %516 = vmatpush1.xpose.msra.mxu0 0.0
    %517 = vmatprep.subr.mxu0 0.0
    %518 = vmatpush1.xpose.msra.mxu0 0.0
    %519 = vmatprep.subr.mxu0 0.0
    %520 = vmatpush1.xpose.msra.mxu0 0.0
    %521 = vmatprep.subr.mxu0 0.0
    %522 = vmatpush1.xpose.msra.mxu0 0.0
    %523 = vmatprep.subr.mxu0 0.0
    %524 = vmatpush1.xpose.msra.mxu0 0.0
    %525 = vmatprep.subr.mxu0 0.0
    %526 = vmatpush1.xpose.msra.mxu0 0.0
    %527 = vmatprep.subr.mxu0 0.0
    %528 = vmatpush1.xpose.msra.mxu0 0.0
    %529 = vmatprep.subr.mxu0 0.0
    %530 = vmatpush1.xpose.msra.mxu0 0.0
    %531 = vmatprep.subr.mxu0 0.0
    %532 = vmatpush1.xpose.msra.mxu0 0.0
    %533 = vmatprep.subr.mxu0 0.0
    %534 = vmatpush1.xpose.msra.mxu0 0.0
    %535 = vmatprep.subr.mxu0 0.0
    %536 = vmatpush1.xpose.msra.mxu0 0.0
    %537 = vmatprep.subr.mxu0 0.0
    %538 = vmatpush1.xpose.msra.mxu0 0.0
    %539 = vmatprep.subr.mxu0 0.0
    %540 = vmatpush1.xpose.msra.mxu0 0.0
    %541 = vmatprep.subr.mxu0 0.0
    %542 = vmatpush1.xpose.msra.mxu0 0.0
    %543 = vmatprep.subr.mxu0 0.0
    %544 = vmatpush1.xpose.msra.mxu0 0.0
    %545 = vmatprep.subr.mxu0 0.0
    %546 = vmatpush1.xpose.msra.mxu0 0.0
    %547 = vmatprep.subr.mxu0 0.0
    %548 = vmatpush1.xpose.msra.mxu0 0.0
    %549 = vmatprep.subr.mxu0 0.0
    %550 = vmatpush1.xpose.msra.mxu0 0.0
    %551 = vmatprep.subr.mxu0 0.0
    %552 = vmatpush1.xpose.msra.mxu0 0.0
    %553 = vmatprep.subr.mxu0 0.0
    %554 = vmatpush1.xpose.msra.mxu0 0.0
    %555 = vmatprep.subr.mxu0 0.0
    %556 = vmatpush1.xpose.msra.mxu0 0.0
    %557 = vmatprep.subr.mxu0 0.0
    %558 = vmatpush1.xpose.msra.mxu0 0.0
    %559 = vmatprep.subr.mxu0 0.0
    %560 = vmatpush1.xpose.msra.mxu0 0.0
    %561 = vmatprep.subr.mxu0 0.0
    %562 = vmatpush1.xpose.msra.mxu0 0.0
    %563 = vmatprep.subr.mxu0 0.0
    %564 = vmatpush1.xpose.msra.mxu0 0.0
    %565 = vmatprep.subr.mxu0 0.0
    %566 = vmatpush1.xpose.msra.mxu0 0.0
    %567 = vmatprep.subr.mxu0 0.0
    %568 = vmatpush1.xpose.msra.mxu0 0.0
    %569 = vmatprep.subr.mxu0 0.0
    %570 = vmatpush1.xpose.msra.mxu0 0.0
    %571 = vmatprep.subr.mxu0 0.0
    %572 = vmatpush1.xpose.msra.mxu0 0.0
    %573 = vmatprep.mubr.f32.mxu0 0.0
    %574 = vmatmul.mubr.f32.gmra.mrb[0].mxu0 %v505
    %v575 = vpop.f32.mrb[0].mxu0
    %v576 = vadd.f32 0.0, %v575
    %v577 = vpop.f32.mrb[0].mxu0
    %578 = vdwg.mxu0
    %v579 = vsel %vm430, %v385, 0
    %v581 = vsel %vm430, %v399, 0
    %583 = vmatprep.subr.mxu0 0.0
    %584 = vmatpush1.xpose.msra.mxu0 %v581
    %585 = vmatprep.subr.mxu0 0.0
    %586 = vmatpush1.xpose.msra.mxu0 0.0
    %587 = vmatprep.subr.mxu0 0.0
    %588 = vmatpush1.xpose.msra.mxu0 0.0
    %589 = vmatprep.subr.mxu0 0.0
    %590 = vmatpush1.xpose.msra.mxu0 0.0
    %591 = vmatprep.subr.mxu0 0.0
    %592 = vmatpush1.xpose.msra.mxu0 0.0
    %593 = vmatprep.subr.mxu0 0.0
    %594 = vmatpush1.xpose.msra.mxu0 0.0
    %595 = vmatprep.subr.mxu0 0.0
    %596 = vmatpush1.xpose.msra.mxu0 0.0
    %597 = vmatprep.subr.mxu0 0.0
    %598 = vmatpush1.xpose.msra.mxu0 0.0
    %599 = vmatprep.subr.mxu0 0.0
    %600 = vmatpush1.xpose.msra.mxu0 0.0
    %601 = vmatprep.subr.mxu0 0.0
    %602 = vmatpush1.xpose.msra.mxu0 0.0
    %603 = vmatprep.subr.mxu0 0.0
    %604 = vmatpush1.xpose.msra.mxu0 0.0
    %605 = vmatprep.subr.mxu0 0.0
    %606 = vmatpush1.xpose.msra.mxu0 0.0
    %607 = vmatprep.subr.mxu0 0.0
    %608 = vmatpush1.xpose.msra.mxu0 0.0
    %609 = vmatprep.subr.mxu0 0.0
    %610 = vmatpush1.xpose.msra.mxu0 0.0
    %611 = vmatprep.subr.mxu0 0.0
    %612 = vmatpush1.xpose.msra.mxu0 0.0
    %613 = vmatprep.subr.mxu0 0.0
    %614 = vmatpush1.xpose.msra.mxu0 0.0
    %615 = vmatprep.subr.mxu0 0.0
    %616 = vmatpush1.xpose.msra.mxu0 0.0
    %617 = vmatprep.subr.mxu0 0.0
    %618 = vmatpush1.xpose.msra.mxu0 0.0
    %619 = vmatprep.subr.mxu0 0.0
    %620 = vmatpush1.xpose.msra.mxu0 0.0
    %621 = vmatprep.subr.mxu0 0.0
    %622 = vmatpush1.xpose.msra.mxu0 0.0
    %623 = vmatprep.subr.mxu0 0.0
    %624 = vmatpush1.xpose.msra.mxu0 0.0
    %625 = vmatprep.subr.mxu0 0.0
    %626 = vmatpush1.xpose.msra.mxu0 0.0
    %627 = vmatprep.subr.mxu0 0.0
    %628 = vmatpush1.xpose.msra.mxu0 0.0
    %629 = vmatprep.subr.mxu0 0.0
    %630 = vmatpush1.xpose.msra.mxu0 0.0
    %631 = vmatprep.subr.mxu0 0.0
    %632 = vmatpush1.xpose.msra.mxu0 0.0
    %633 = vmatprep.subr.mxu0 0.0
    %634 = vmatpush1.xpose.msra.mxu0 0.0
    %635 = vmatprep.subr.mxu0 0.0
    %636 = vmatpush1.xpose.msra.mxu0 0.0
    %637 = vmatprep.subr.mxu0 0.0
    %638 = vmatpush1.xpose.msra.mxu0 0.0
    %639 = vmatprep.subr.mxu0 0.0
    %640 = vmatpush1.xpose.msra.mxu0 0.0
    %641 = vmatprep.subr.mxu0 0.0
    %642 = vmatpush1.xpose.msra.mxu0 0.0
    %643 = vmatprep.subr.mxu0 0.0
    %644 = vmatpush1.xpose.msra.mxu0 0.0
    %645 = vmatprep.subr.mxu0 0.0
    %646 = vmatpush1.xpose.msra.mxu0 0.0
    %647 = vmatprep.mubr.f32.mxu0 0.0
    %648 = vmatmul.mubr.f32.gmra.mrb[0].mxu0 %v579
    %v649 = vpop.f32.mrb[0].mxu0
    %v650 = vadd.f32 0.0, %v649
    %v651 = vpop.f32.mrb[0].mxu0
    %652 = vdwg.mxu0
    %v653 = vsel %vm430, %v387, 0
    %v655 = vsel %vm430, %v401, 0
    %657 = vmatprep.subr.mxu0 0.0
    %658 = vmatpush1.xpose.msra.mxu0 %v655
    %659 = vmatprep.subr.mxu0 0.0
    %660 = vmatpush1.xpose.msra.mxu0 0.0
    %661 = vmatprep.subr.mxu0 0.0
    %662 = vmatpush1.xpose.msra.mxu0 0.0
    %663 = vmatprep.subr.mxu0 0.0
    %664 = vmatpush1.xpose.msra.mxu0 0.0
    %665 = vmatprep.subr.mxu0 0.0
    %666 = vmatpush1.xpose.msra.mxu0 0.0
    %667 = vmatprep.subr.mxu0 0.0
    %668 = vmatpush1.xpose.msra.mxu0 0.0
    %669 = vmatprep.subr.mxu0 0.0
    %670 = vmatpush1.xpose.msra.mxu0 0.0
    %671 = vmatprep.subr.mxu0 0.0
    %672 = vmatpush1.xpose.msra.mxu0 0.0
    %673 = vmatprep.subr.mxu0 0.0
    %674 = vmatpush1.xpose.msra.mxu0 0.0
    %675 = vmatprep.subr.mxu0 0.0
    %676 = vmatpush1.xpose.msra.mxu0 0.0
    %677 = vmatprep.subr.mxu0 0.0
    %678 = vmatpush1.xpose.msra.mxu0 0.0
    %679 = vmatprep.subr.mxu0 0.0
    %680 = vmatpush1.xpose.msra.mxu0 0.0
    %681 = vmatprep.subr.mxu0 0.0
    %682 = vmatpush1.xpose.msra.mxu0 0.0
    %683 = vmatprep.subr.mxu0 0.0
    %684 = vmatpush1.xpose.msra.mxu0 0.0
    %685 = vmatprep.subr.mxu0 0.0
    %686 = vmatpush1.xpose.msra.mxu0 0.0
    %687 = vmatprep.subr.mxu0 0.0
    %688 = vmatpush1.xpose.msra.mxu0 0.0
    %689 = vmatprep.subr.mxu0 0.0
    %690 = vmatpush1.xpose.msra.mxu0 0.0
    %691 = vmatprep.subr.mxu0 0.0
    %692 = vmatpush1.xpose.msra.mxu0 0.0
    %693 = vmatprep.subr.mxu0 0.0
    %694 = vmatpush1.xpose.msra.mxu0 0.0
    %695 = vmatprep.subr.mxu0 0.0
    %696 = vmatpush1.xpose.msra.mxu0 0.0
    %697 = vmatprep.subr.mxu0 0.0
    %698 = vmatpush1.xpose.msra.mxu0 0.0
    %699 = vmatprep.subr.mxu0 0.0
    %700 = vmatpush1.xpose.msra.mxu0 0.0
    %701 = vmatprep.subr.mxu0 0.0
    %702 = vmatpush1.xpose.msra.mxu0 0.0
    %703 = vmatprep.subr.mxu0 0.0
    %704 = vmatpush1.xpose.msra.mxu0 0.0
    %705 = vmatprep.subr.mxu0 0.0
    %706 = vmatpush1.xpose.msra.mxu0 0.0
    %707 = vmatprep.subr.mxu0 0.0
    %708 = vmatpush1.xpose.msra.mxu0 0.0
    %709 = vmatprep.subr.mxu0 0.0
    %710 = vmatpush1.xpose.msra.mxu0 0.0
    %711 = vmatprep.subr.mxu0 0.0
    %712 = vmatpush1.xpose.msra.mxu0 0.0
    %713 = vmatprep.subr.mxu0 0.0
    %714 = vmatpush1.xpose.msra.mxu0 0.0
    %715 = vmatprep.subr.mxu0 0.0
    %716 = vmatpush1.xpose.msra.mxu0 0.0
    %717 = vmatprep.subr.mxu0 0.0
    %718 = vmatpush1.xpose.msra.mxu0 0.0
    %719 = vmatprep.subr.mxu0 0.0
    %720 = vmatpush1.xpose.msra.mxu0 0.0
    %721 = vmatprep.mubr.f32.mxu0 0.0
    %722 = vmatmul.mubr.f32.gmra.mrb[0].mxu0 %v653
    %v723 = vpop.f32.mrb[0].mxu0
    %v724 = vadd.f32 0.0, %v723
    %v725 = vpop.f32.mrb[0].mxu0
    %726 = vdwg.mxu0
    %v727 = vsel %vm430, %v389, 0
    %v729 = vsel %vm430, %v403, 0
    %731 = vmatprep.subr.mxu0 0.0
    %732 = vmatpush1.xpose.msra.mxu0 %v729
    %733 = vmatprep.subr.mxu0 0.0
    %734 = vmatpush1.xpose.msra.mxu0 0.0
    %735 = vmatprep.subr.mxu0 0.0
    %736 = vmatpush1.xpose.msra.mxu0 0.0
    %737 = vmatprep.subr.mxu0 0.0
    %738 = vmatpush1.xpose.msra.mxu0 0.0
    %739 = vmatprep.subr.mxu0 0.0
    %740 = vmatpush1.xpose.msra.mxu0 0.0
    %741 = vmatprep.subr.mxu0 0.0
    %742 = vmatpush1.xpose.msra.mxu0 0.0
    %743 = vmatprep.subr.mxu0 0.0
    %744 = vmatpush1.xpose.msra.mxu0 0.0
    %745 = vmatprep.subr.mxu0 0.0
    %746 = vmatpush1.xpose.msra.mxu0 0.0
    %747 = vmatprep.subr.mxu0 0.0
    %748 = vmatpush1.xpose.msra.mxu0 0.0
    %749 = vmatprep.subr.mxu0 0.0
    %750 = vmatpush1.xpose.msra.mxu0 0.0
    %751 = vmatprep.subr.mxu0 0.0
    %752 = vmatpush1.xpose.msra.mxu0 0.0
    %753 = vmatprep.subr.mxu0 0.0
    %754 = vmatpush1.xpose.msra.mxu0 0.0
    %755 = vmatprep.subr.mxu0 0.0
    %756 = vmatpush1.xpose.msra.mxu0 0.0
    %757 = vmatprep.subr.mxu0 0.0
    %758 = vmatpush1.xpose.msra.mxu0 0.0
    %759 = vmatprep.subr.mxu0 0.0
    %760 = vmatpush1.xpose.msra.mxu0 0.0
    %761 = vmatprep.subr.mxu0 0.0
    %762 = vmatpush1.xpose.msra.mxu0 0.0
    %763 = vmatprep.subr.mxu0 0.0
    %764 = vmatpush1.xpose.msra.mxu0 0.0
    %765 = vmatprep.subr.mxu0 0.0
    %766 = vmatpush1.xpose.msra.mxu0 0.0
    %767 = vmatprep.subr.mxu0 0.0
    %768 = vmatpush1.xpose.msra.mxu0 0.0
    %769 = vmatprep.subr.mxu0 0.0
    %770 = vmatpush1.xpose.msra.mxu0 0.0
    %771 = vmatprep.subr.mxu0 0.0
    %772 = vmatpush1.xpose.msra.mxu0 0.0
    %773 = vmatprep.subr.mxu0 0.0
    %774 = vmatpush1.xpose.msra.mxu0 0.0
    %775 = vmatprep.subr.mxu0 0.0
    %776 = vmatpush1.xpose.msra.mxu0 0.0
    %777 = vmatprep.subr.mxu0 0.0
    %778 = vmatpush1.xpose.msra.mxu0 0.0
    %779 = vmatprep.subr.mxu0 0.0
    %780 = vmatpush1.xpose.msra.mxu0 0.0
    %781 = vmatprep.subr.mxu0 0.0
    %782 = vmatpush1.xpose.msra.mxu0 0.0
    %783 = vmatprep.subr.mxu0 0.0
    %784 = vmatpush1.xpose.msra.mxu0 0.0
    %785 = vmatprep.subr.mxu0 0.0
    %786 = vmatpush1.xpose.msra.mxu0 0.0
    %787 = vmatprep.subr.mxu0 0.0
    %788 = vmatpush1.xpose.msra.mxu0 0.0
    %789 = vmatprep.subr.mxu0 0.0
    %790 = vmatpush1.xpose.msra.mxu0 0.0
    %791 = vmatprep.subr.mxu0 0.0
    %792 = vmatpush1.xpose.msra.mxu0 0.0
    %793 = vmatprep.subr.mxu0 0.0
    %794 = vmatpush1.xpose.msra.mxu0 0.0
    %795 = vmatprep.mubr.f32.mxu0 0.0
    %796 = vmatmul.mubr.f32.gmra.mrb[0].mxu0 %v727
    %v797 = vpop.f32.mrb[0].mxu0
    %v798 = vadd.f32 0.0, %v797
    %v799 = vpop.f32.mrb[0].mxu0
    %800 = vdwg.mxu0
    %v801 = vsel %vm430, %v391, 0
    %v803 = vsel %vm430, %v405, 0
    %805 = vmatprep.subr.mxu0 0.0
    %806 = vmatpush1.xpose.msra.mxu0 %v803
    %807 = vmatprep.subr.mxu0 0.0
    %808 = vmatpush1.xpose.msra.mxu0 0.0
    %809 = vmatprep.subr.mxu0 0.0
    %810 = vmatpush1.xpose.msra.mxu0 0.0
    %811 = vmatprep.subr.mxu0 0.0
    %812 = vmatpush1.xpose.msra.mxu0 0.0
    %813 = vmatprep.subr.mxu0 0.0
    %814 = vmatpush1.xpose.msra.mxu0 0.0
    %815 = vmatprep.subr.mxu0 0.0
    %816 = vmatpush1.xpose.msra.mxu0 0.0
    %817 = vmatprep.subr.mxu0 0.0
    %818 = vmatpush1.xpose.msra.mxu0 0.0
    %819 = vmatprep.subr.mxu0 0.0
    %820 = vmatpush1.xpose.msra.mxu0 0.0
    %821 = vmatprep.subr.mxu0 0.0
    %822 = vmatpush1.xpose.msra.mxu0 0.0
    %823 = vmatprep.subr.mxu0 0.0
    %824 = vmatpush1.xpose.msra.mxu0 0.0
    %825 = vmatprep.subr.mxu0 0.0
    %826 = vmatpush1.xpose.msra.mxu0 0.0
    %827 = vmatprep.subr.mxu0 0.0
    %828 = vmatpush1.xpose.msra.mxu0 0.0
    %829 = vmatprep.subr.mxu0 0.0
    %830 = vmatpush1.xpose.msra.mxu0 0.0
    %831 = vmatprep.subr.mxu0 0.0
    %832 = vmatpush1.xpose.msra.mxu0 0.0
    %833 = vmatprep.subr.mxu0 0.0
    %834 = vmatpush1.xpose.msra.mxu0 0.0
    %835 = vmatprep.subr.mxu0 0.0
    %836 = vmatpush1.xpose.msra.mxu0 0.0
    %837 = vmatprep.subr.mxu0 0.0
    %838 = vmatpush1.xpose.msra.mxu0 0.0
    %839 = vmatprep.subr.mxu0 0.0
    %840 = vmatpush1.xpose.msra.mxu0 0.0
    %841 = vmatprep.subr.mxu0 0.0
    %842 = vmatpush1.xpose.msra.mxu0 0.0
    %843 = vmatprep.subr.mxu0 0.0
    %844 = vmatpush1.xpose.msra.mxu0 0.0
    %845 = vmatprep.subr.mxu0 0.0
    %846 = vmatpush1.xpose.msra.mxu0 0.0
    %847 = vmatprep.subr.mxu0 0.0
    %848 = vmatpush1.xpose.msra.mxu0 0.0
    %849 = vmatprep.subr.mxu0 0.0
    %850 = vmatpush1.xpose.msra.mxu0 0.0
    %851 = vmatprep.subr.mxu0 0.0
    %852 = vmatpush1.xpose.msra.mxu0 0.0
    %853 = vmatprep.subr.mxu0 0.0
    %854 = vmatpush1.xpose.msra.mxu0 0.0
    %855 = vmatprep.subr.mxu0 0.0
    %856 = vmatpush1.xpose.msra.mxu0 0.0
    %857 = vmatprep.subr.mxu0 0.0
    %858 = vmatpush1.xpose.msra.mxu0 0.0
    %859 = vmatprep.subr.mxu0 0.0
    %860 = vmatpush1.xpose.msra.mxu0 0.0
    %861 = vmatprep.subr.mxu0 0.0
    %862 = vmatpush1.xpose.msra.mxu0 0.0
    %863 = vmatprep.subr.mxu0 0.0
    %864 = vmatpush1.xpose.msra.mxu0 0.0
    %865 = vmatprep.subr.mxu0 0.0
    %866 = vmatpush1.xpose.msra.mxu0 0.0
    %867 = vmatprep.subr.mxu0 0.0
    %868 = vmatpush1.xpose.msra.mxu0 0.0
    %869 = vmatprep.mubr.f32.mxu0 0.0
    %870 = vmatmul.mubr.f32.gmra.mrb[0].mxu0 %v801
    %v871 = vpop.f32.mrb[0].mxu0
    %v872 = vadd.f32 0.0, %v871
    %v873 = vpop.f32.mrb[0].mxu0
    %874 = vdwg.mxu0
    %v875 = vsel %vm430, %v393, 0
    %v877 = vsel %vm430, %v407, 0
    %879 = vmatprep.subr.mxu0 0.0
    %880 = vmatpush1.xpose.msra.mxu0 %v877
    %881 = vmatprep.subr.mxu0 0.0
    %882 = vmatpush1.xpose.msra.mxu0 0.0
    %883 = vmatprep.subr.mxu0 0.0
    %884 = vmatpush1.xpose.msra.mxu0 0.0
    %885 = vmatprep.subr.mxu0 0.0
    %886 = vmatpush1.xpose.msra.mxu0 0.0
    %887 = vmatprep.subr.mxu0 0.0
    %888 = vmatpush1.xpose.msra.mxu0 0.0
    %889 = vmatprep.subr.mxu0 0.0
    %890 = vmatpush1.xpose.msra.mxu0 0.0
    %891 = vmatprep.subr.mxu0 0.0
    %892 = vmatpush1.xpose.msra.mxu0 0.0
    %893 = vmatprep.subr.mxu0 0.0
    %894 = vmatpush1.xpose.msra.mxu0 0.0
    %895 = vmatprep.subr.mxu0 0.0
    %896 = vmatpush1.xpose.msra.mxu0 0.0
    %897 = vmatprep.subr.mxu0 0.0
    %898 = vmatpush1.xpose.msra.mxu0 0.0
    %899 = vmatprep.subr.mxu0 0.0
    %900 = vmatpush1.xpose.msra.mxu0 0.0
    %901 = vmatprep.subr.mxu0 0.0
    %902 = vmatpush1.xpose.msra.mxu0 0.0
    %903 = vmatprep.subr.mxu0 0.0
    %904 = vmatpush1.xpose.msra.mxu0 0.0
    %905 = vmatprep.subr.mxu0 0.0
    %906 = vmatpush1.xpose.msra.mxu0 0.0
    %907 = vmatprep.subr.mxu0 0.0
    %908 = vmatpush1.xpose.msra.mxu0 0.0
    %909 = vmatprep.subr.mxu0 0.0
    %910 = vmatpush1.xpose.msra.mxu0 0.0
    %911 = vmatprep.subr.mxu0 0.0
    %912 = vmatpush1.xpose.msra.mxu0 0.0
    %913 = vmatprep.subr.mxu0 0.0
    %914 = vmatpush1.xpose.msra.mxu0 0.0
    %915 = vmatprep.subr.mxu0 0.0
    %916 = vmatpush1.xpose.msra.mxu0 0.0
    %917 = vmatprep.subr.mxu0 0.0
    %918 = vmatpush1.xpose.msra.mxu0 0.0
    %919 = vmatprep.subr.mxu0 0.0
    %920 = vmatpush1.xpose.msra.mxu0 0.0
    %921 = vmatprep.subr.mxu0 0.0
    %922 = vmatpush1.xpose.msra.mxu0 0.0
    %923 = vmatprep.subr.mxu0 0.0
    %924 = vmatpush1.xpose.msra.mxu0 0.0
    %925 = vmatprep.subr.mxu0 0.0
    %926 = vmatpush1.xpose.msra.mxu0 0.0
    %927 = vmatprep.subr.mxu0 0.0
    %928 = vmatpush1.xpose.msra.mxu0 0.0
    %929 = vmatprep.subr.mxu0 0.0
    %930 = vmatpush1.xpose.msra.mxu0 0.0
    %931 = vmatprep.subr.mxu0 0.0
    %932 = vmatpush1.xpose.msra.mxu0 0.0
    %933 = vmatprep.subr.mxu0 0.0
    %934 = vmatpush1.xpose.msra.mxu0 0.0
    %935 = vmatprep.subr.mxu0 0.0
    %936 = vmatpush1.xpose.msra.mxu0 0.0
    %937 = vmatprep.subr.mxu0 0.0
    %938 = vmatpush1.xpose.msra.mxu0 0.0
    %939 = vmatprep.subr.mxu0 0.0
    %940 = vmatpush1.xpose.msra.mxu0 0.0
    %941 = vmatprep.subr.mxu0 0.0
    %942 = vmatpush1.xpose.msra.mxu0 0.0
    %943 = vmatprep.mubr.f32.mxu0 0.0
    %944 = vmatmul.mubr.f32.gmra.mrb[0].mxu0 %v875
    %v945 = vpop.f32.mrb[0].mxu0
    %v946 = vadd.f32 0.0, %v945
    %v947 = vpop.f32.mrb[0].mxu0
    %948 = vdwg.mxu0
    %v949 = vsel %vm430, %v395, 0
    %v951 = vsel %vm430, %v409, 0
    %953 = vmatprep.subr.mxu0 0.0
    %954 = vmatpush1.xpose.msra.mxu0 %v951
    %955 = vmatprep.subr.mxu0 0.0
    %956 = vmatpush1.xpose.msra.mxu0 0.0
    %957 = vmatprep.subr.mxu0 0.0
    %958 = vmatpush1.xpose.msra.mxu0 0.0
    %959 = vmatprep.subr.mxu0 0.0
    %960 = vmatpush1.xpose.msra.mxu0 0.0
    %961 = vmatprep.subr.mxu0 0.0
    %962 = vmatpush1.xpose.msra.mxu0 0.0
    %963 = vmatprep.subr.mxu0 0.0
    %964 = vmatpush1.xpose.msra.mxu0 0.0
    %965 = vmatprep.subr.mxu0 0.0
    %966 = vmatpush1.xpose.msra.mxu0 0.0
    %967 = vmatprep.subr.mxu0 0.0
    %968 = vmatpush1.xpose.msra.mxu0 0.0
    %969 = vmatprep.subr.mxu0 0.0
    %970 = vmatpush1.xpose.msra.mxu0 0.0
    %971 = vmatprep.subr.mxu0 0.0
    %972 = vmatpush1.xpose.msra.mxu0 0.0
    %973 = vmatprep.subr.mxu0 0.0
    %974 = vmatpush1.xpose.msra.mxu0 0.0
    %975 = vmatprep.subr.mxu0 0.0
    %976 = vmatpush1.xpose.msra.mxu0 0.0
    %977 = vmatprep.subr.mxu0 0.0
    %978 = vmatpush1.xpose.msra.mxu0 0.0
    %979 = vmatprep.subr.mxu0 0.0
    %980 = vmatpush1.xpose.msra.mxu0 0.0
    %981 = vmatprep.subr.mxu0 0.0
    %982 = vmatpush1.xpose.msra.mxu0 0.0
    %983 = vmatprep.subr.mxu0 0.0
    %984 = vmatpush1.xpose.msra.mxu0 0.0
    %985 = vmatprep.subr.mxu0 0.0
    %986 = vmatpush1.xpose.msra.mxu0 0.0
    %987 = vmatprep.subr.mxu0 0.0
    %988 = vmatpush1.xpose.msra.mxu0 0.0
    %989 = vmatprep.subr.mxu0 0.0
    %990 = vmatpush1.xpose.msra.mxu0 0.0
    %991 = vmatprep.subr.mxu0 0.0
    %992 = vmatpush1.xpose.msra.mxu0 0.0
    %993 = vmatprep.subr.mxu0 0.0
    %994 = vmatpush1.xpose.msra.mxu0 0.0
    %995 = vmatprep.subr.mxu0 0.0
    %996 = vmatpush1.xpose.msra.mxu0 0.0
    %997 = vmatprep.subr.mxu0 0.0
    %998 = vmatpush1.xpose.msra.mxu0 0.0
    %999 = vmatprep.subr.mxu0 0.0
    %1000 = vmatpush1.xpose.msra.mxu0 0.0
    %1001 = vmatprep.subr.mxu0 0.0
    %1002 = vmatpush1.xpose.msra.mxu0 0.0
    %1003 = vmatprep.subr.mxu0 0.0
    %1004 = vmatpush1.xpose.msra.mxu0 0.0
    %1005 = vmatprep.subr.mxu0 0.0
    %1006 = vmatpush1.xpose.msra.mxu0 0.0
    %1007 = vmatprep.subr.mxu0 0.0
    %1008 = vmatpush1.xpose.msra.mxu0 0.0
    %1009 = vmatprep.subr.mxu0 0.0
    %1010 = vmatpush1.xpose.msra.mxu0 0.0
    %1011 = vmatprep.subr.mxu0 0.0
    %1012 = vmatpush1.xpose.msra.mxu0 0.0
    %1013 = vmatprep.subr.mxu0 0.0
    %1014 = vmatpush1.xpose.msra.mxu0 0.0
    %1015 = vmatprep.subr.mxu0 0.0
    %1016 = vmatpush1.xpose.msra.mxu0 0.0
    %1017 = vmatprep.mubr.f32.mxu0 0.0
    %1018 = vmatmul.mubr.f32.gmra.mrb[0].mxu0 %v949
    %v1019 = vpop.f32.mrb[0].mxu0
    %v1020 = vadd.f32 0.0, %v1019
    %v1021 = vpop.f32.mrb[0].mxu0
    %1022 = vdwg.mxu0
    %v1023 = vmul.f32 %v502, 0.35355338
    %v1024 = vmul.f32 %v576, 0.35355338
    %v1025 = vmul.f32 %v650, 0.35355338
    %v1026 = vmul.f32 %v724, 0.35355338
    %v1027 = vmul.f32 %v798, 0.35355338
    %v1028 = vmul.f32 %v872, 0.35355338
    %v1029 = vmul.f32 %v946, 0.35355338
    %v1030 = vmul.f32 %v1020, 0.35355338
    %v1031 = vsel %vm430, %v1023, -inf
    %1032 = vmax.xlane.f32.xlu0 %v1031
    %v1033 = vpop.xlane.xlu0 %1032
    %v1034 = vsel %vm430, %v1024, -inf
    %1035 = vmax.xlane.f32.xlu0 %v1034
    %v1036 = vpop.xlane.xlu0 %1035
    %v1037 = vsel %vm430, %v1025, -inf
    %1038 = vmax.xlane.f32.xlu0 %v1037
    %v1039 = vpop.xlane.xlu0 %1038
    %v1040 = vsel %vm430, %v1026, -inf
    %1041 = vmax.xlane.f32.xlu0 %v1040
    %v1042 = vpop.xlane.xlu0 %1041
    %v1043 = vsel %vm430, %v1027, -inf
    %1044 = vmax.xlane.f32.xlu0 %v1043
    %v1045 = vpop.xlane.xlu0 %1044
    %v1046 = vsel %vm430, %v1028, -inf
    %1047 = vmax.xlane.f32.xlu0 %v1046
    %v1048 = vpop.xlane.xlu0 %1047
    %v1049 = vsel %vm430, %v1029, -inf
    %1050 = vmax.xlane.f32.xlu0 %v1049
    %v1051 = vpop.xlane.xlu0 %1050
    %v1052 = vsel %vm430, %v1030, -inf
    %1053 = vmax.xlane.f32.xlu0 %v1052
    %v1054 = vpop.xlane.xlu0 %1053
    %v1055 = vsub.f32 %v1023, %v1033
    %v1056 = vsub.f32 %v1024, %v1036
    %v1057 = vsub.f32 %v1025, %v1039
    %v1058 = vsub.f32 %v1026, %v1042
    %v1059 = vsub.f32 %v1027, %v1045
    %v1060 = vsub.f32 %v1028, %v1048
    %v1061 = vsub.f32 %v1029, %v1051
    %v1062 = vsub.f32 %v1030, %v1054
    %v1063 = vmul.f32 %v1055, 1.442695
    %v1064 = vpow.pop %v1063
    %v1065 = vmul.f32 %v1056, 1.442695
    %v1066 = vpow.pop %v1065
    %v1067 = vmul.f32 %v1057, 1.442695
    %v1068 = vpow.pop %v1067
    %v1069 = vmul.f32 %v1058, 1.442695
    %v1070 = vpow.pop %v1069
    %v1071 = vmul.f32 %v1059, 1.442695
    %v1072 = vpow.pop %v1071
    %v1073 = vmul.f32 %v1060, 1.442695
    %v1074 = vpow.pop %v1073
    %v1075 = vmul.f32 %v1061, 1.442695
    %v1076 = vpow.pop %v1075
    %v1077 = vmul.f32 %v1062, 1.442695
    %v1078 = vpow.pop %v1077
    %v1079 = vsel %vm430, %v1064, 0.0
    %1080 = vadd.xlane.f32.xlu0 %v1079
    %v1081 = vpop.xlane.xlu0 %1080
    %v1082 = vsel %vm430, %v1066, 0.0
    %1083 = vadd.xlane.f32.xlu0 %v1082
    %v1084 = vpop.xlane.xlu0 %1083
    %v1085 = vsel %vm430, %v1068, 0.0
    %1086 = vadd.xlane.f32.xlu0 %v1085
    %v1087 = vpop.xlane.xlu0 %1086
    %v1088 = vsel %vm430, %v1070, 0.0
    %1089 = vadd.xlane.f32.xlu0 %v1088
    %v1090 = vpop.xlane.xlu0 %1089
    %v1091 = vsel %vm430, %v1072, 0.0
    %1092 = vadd.xlane.f32.xlu0 %v1091
    %v1093 = vpop.xlane.xlu0 %1092
    %v1094 = vsel %vm430, %v1074, 0.0
    %1095 = vadd.xlane.f32.xlu0 %v1094
    %v1096 = vpop.xlane.xlu0 %1095
    %v1097 = vsel %vm430, %v1076, 0.0
    %1098 = vadd.xlane.f32.xlu0 %v1097
    %v1099 = vpop.xlane.xlu0 %1098
    %v1100 = vsel %vm430, %v1078, 0.0
    %1101 = vadd.xlane.f32.xlu0 %v1100
    %v1102 = vpop.xlane.xlu0 %1101
    %v1103 = vrcp.pop %v1081
    %v1104 = vmul.f32 %v1064, %v1103
    %v1105 = vrcp.pop %v1084
    %v1106 = vmul.f32 %v1066, %v1105
    %v1107 = vrcp.pop %v1087
    %v1108 = vmul.f32 %v1068, %v1107
    %v1109 = vrcp.pop %v1090
    %v1110 = vmul.f32 %v1070, %v1109
    %v1111 = vrcp.pop %v1093
    %v1112 = vmul.f32 %v1072, %v1111
    %v1113 = vrcp.pop %v1096
    %v1114 = vmul.f32 %v1074, %v1113
    %v1115 = vrcp.pop %v1099
    %v1116 = vmul.f32 %v1076, %v1115
    %v1117 = vrcp.pop %v1102
    %v1118 = vmul.f32 %v1078, %v1117
    %v1120 = vsel %vm430, %v1104, 0
    %1122 = vmatprep.subr.mxu0 0.0
    %1123 = vmatpush1.msra.mxu0 %v374
    %1124 = vmatprep.subr.mxu0 0.0
    %1125 = vmatpush1.msra.mxu0 0.0
    %1126 = vmatprep.subr.mxu0 0.0
    %1127 = vmatpush1.msra.mxu0 0.0
    %1128 = vmatprep.subr.mxu0 0.0
    %1129 = vmatpush1.msra.mxu0 0.0
    %1130 = vmatprep.subr.mxu0 0.0
    %1131 = vmatpush1.msra.mxu0 0.0
    %1132 = vmatprep.subr.mxu0 0.0
    %1133 = vmatpush1.msra.mxu0 0.0
    %1134 = vmatprep.subr.mxu0 0.0
    %1135 = vmatpush1.msra.mxu0 0.0
    %1136 = vmatprep.subr.mxu0 0.0
    %1137 = vmatpush1.msra.mxu0 0.0
    %1138 = vmatprep.subr.mxu0 0.0
    %1139 = vmatpush1.msra.mxu0 0.0
    %1140 = vmatprep.subr.mxu0 0.0
    %1141 = vmatpush1.msra.mxu0 0.0
    %1142 = vmatprep.subr.mxu0 0.0
    %1143 = vmatpush1.msra.mxu0 0.0
    %1144 = vmatprep.subr.mxu0 0.0
    %1145 = vmatpush1.msra.mxu0 0.0
    %1146 = vmatprep.subr.mxu0 0.0
    %1147 = vmatpush1.msra.mxu0 0.0
    %1148 = vmatprep.subr.mxu0 0.0
    %1149 = vmatpush1.msra.mxu0 0.0
    %1150 = vmatprep.subr.mxu0 0.0
    %1151 = vmatpush1.msra.mxu0 0.0
    %1152 = vmatprep.subr.mxu0 0.0
    %1153 = vmatpush1.msra.mxu0 0.0
    %1154 = vmatprep.subr.mxu0 0.0
    %1155 = vmatpush1.msra.mxu0 0.0
    %1156 = vmatprep.subr.mxu0 0.0
    %1157 = vmatpush1.msra.mxu0 0.0
    %1158 = vmatprep.subr.mxu0 0.0
    %1159 = vmatpush1.msra.mxu0 0.0
    %1160 = vmatprep.subr.mxu0 0.0
    %1161 = vmatpush1.msra.mxu0 0.0
    %1162 = vmatprep.subr.mxu0 0.0
    %1163 = vmatpush1.msra.mxu0 0.0
    %1164 = vmatprep.subr.mxu0 0.0
    %1165 = vmatpush1.msra.mxu0 0.0
    %1166 = vmatprep.subr.mxu0 0.0
    %1167 = vmatpush1.msra.mxu0 0.0
    %1168 = vmatprep.subr.mxu0 0.0
    %1169 = vmatpush1.msra.mxu0 0.0
    %1170 = vmatprep.subr.mxu0 0.0
    %1171 = vmatpush1.msra.mxu0 0.0
    %1172 = vmatprep.subr.mxu0 0.0
    %1173 = vmatpush1.msra.mxu0 0.0
    %1174 = vmatprep.subr.mxu0 0.0
    %1175 = vmatpush1.msra.mxu0 0.0
    %1176 = vmatprep.subr.mxu0 0.0
    %1177 = vmatpush1.msra.mxu0 0.0
    %1178 = vmatprep.subr.mxu0 0.0
    %1179 = vmatpush1.msra.mxu0 0.0
    %1180 = vmatprep.subr.mxu0 0.0
    %1181 = vmatpush1.msra.mxu0 0.0
    %1182 = vmatprep.subr.mxu0 0.0
    %1183 = vmatpush1.msra.mxu0 0.0
    %1184 = vmatprep.subr.mxu0 0.0
    %1185 = vmatpush1.msra.mxu0 0.0
    %1186 = vmatprep.mubr.f32.mxu0 0.0
    %1187 = vmatmul.mubr.f32.gmra.mrb[0].mxu0 %v1120
    %v1188 = vpop.f32.mrb[0].mxu0
    %v1189 = vadd.f32 0.0, %v1188
    %v1190 = vpop.f32.mrb[0].mxu0
    %1191 = vdwg.mxu0
    %v1193 = vsel %vm430, %v1106, 0
    %1195 = vmatprep.subr.mxu0 0.0
    %1196 = vmatpush1.msra.mxu0 %v379
    %1197 = vmatprep.subr.mxu0 0.0
    %1198 = vmatpush1.msra.mxu0 0.0
    %1199 = vmatprep.subr.mxu0 0.0
    %1200 = vmatpush1.msra.mxu0 0.0
    %1201 = vmatprep.subr.mxu0 0.0
    %1202 = vmatpush1.msra.mxu0 0.0
    %1203 = vmatprep.subr.mxu0 0.0
    %1204 = vmatpush1.msra.mxu0 0.0
    %1205 = vmatprep.subr.mxu0 0.0
    %1206 = vmatpush1.msra.mxu0 0.0
    %1207 = vmatprep.subr.mxu0 0.0
    %1208 = vmatpush1.msra.mxu0 0.0
    %1209 = vmatprep.subr.mxu0 0.0
    %1210 = vmatpush1.msra.mxu0 0.0
    %1211 = vmatprep.subr.mxu0 0.0
    %1212 = vmatpush1.msra.mxu0 0.0
    %1213 = vmatprep.subr.mxu0 0.0
    %1214 = vmatpush1.msra.mxu0 0.0
    %1215 = vmatprep.subr.mxu0 0.0
    %1216 = vmatpush1.msra.mxu0 0.0
    %1217 = vmatprep.subr.mxu0 0.0
    %1218 = vmatpush1.msra.mxu0 0.0
    %1219 = vmatprep.subr.mxu0 0.0
    %1220 = vmatpush1.msra.mxu0 0.0
    %1221 = vmatprep.subr.mxu0 0.0
    %1222 = vmatpush1.msra.mxu0 0.0
    %1223 = vmatprep.subr.mxu0 0.0
    %1224 = vmatpush1.msra.mxu0 0.0
    %1225 = vmatprep.subr.mxu0 0.0
    %1226 = vmatpush1.msra.mxu0 0.0
    %1227 = vmatprep.subr.mxu0 0.0
    %1228 = vmatpush1.msra.mxu0 0.0
    %1229 = vmatprep.subr.mxu0 0.0
    %1230 = vmatpush1.msra.mxu0 0.0
    %1231 = vmatprep.subr.mxu0 0.0
    %1232 = vmatpush1.msra.mxu0 0.0
    %1233 = vmatprep.subr.mxu0 0.0
    %1234 = vmatpush1.msra.mxu0 0.0
    %1235 = vmatprep.subr.mxu0 0.0
    %1236 = vmatpush1.msra.mxu0 0.0
    %1237 = vmatprep.subr.mxu0 0.0
    %1238 = vmatpush1.msra.mxu0 0.0
    %1239 = vmatprep.subr.mxu0 0.0
    %1240 = vmatpush1.msra.mxu0 0.0
    %1241 = vmatprep.subr.mxu0 0.0
    %1242 = vmatpush1.msra.mxu0 0.0
    %1243 = vmatprep.subr.mxu0 0.0
    %1244 = vmatpush1.msra.mxu0 0.0
    %1245 = vmatprep.subr.mxu0 0.0
    %1246 = vmatpush1.msra.mxu0 0.0
    %1247 = vmatprep.subr.mxu0 0.0
    %1248 = vmatpush1.msra.mxu0 0.0
    %1249 = vmatprep.subr.mxu0 0.0
    %1250 = vmatpush1.msra.mxu0 0.0
    %1251 = vmatprep.subr.mxu0 0.0
    %1252 = vmatpush1.msra.mxu0 0.0
    %1253 = vmatprep.subr.mxu0 0.0
    %1254 = vmatpush1.msra.mxu0 0.0
    %1255 = vmatprep.subr.mxu0 0.0
    %1256 = vmatpush1.msra.mxu0 0.0
    %1257 = vmatprep.subr.mxu0 0.0
    %1258 = vmatpush1.msra.mxu0 0.0
    %1259 = vmatprep.mubr.f32.mxu0 0.0
    %1260 = vmatmul.mubr.f32.gmra.mrb[0].mxu0 %v1193
    %v1261 = vpop.f32.mrb[0].mxu0
    %v1262 = vadd.f32 0.0, %v1261
    %v1263 = vpop.f32.mrb[0].mxu0
    %1264 = vdwg.mxu0
    %v1266 = vsel %vm430, %v1108, 0
    %1268 = vmatprep.subr.mxu0 0.0
    %1269 = vmatpush1.msra.mxu0 %v413
    %1270 = vmatprep.subr.mxu0 0.0
    %1271 = vmatpush1.msra.mxu0 0.0
    %1272 = vmatprep.subr.mxu0 0.0
    %1273 = vmatpush1.msra.mxu0 0.0
    %1274 = vmatprep.subr.mxu0 0.0
    %1275 = vmatpush1.msra.mxu0 0.0
    %1276 = vmatprep.subr.mxu0 0.0
    %1277 = vmatpush1.msra.mxu0 0.0
    %1278 = vmatprep.subr.mxu0 0.0
    %1279 = vmatpush1.msra.mxu0 0.0
    %1280 = vmatprep.subr.mxu0 0.0
    %1281 = vmatpush1.msra.mxu0 0.0
    %1282 = vmatprep.subr.mxu0 0.0
    %1283 = vmatpush1.msra.mxu0 0.0
    %1284 = vmatprep.subr.mxu0 0.0
    %1285 = vmatpush1.msra.mxu0 0.0
    %1286 = vmatprep.subr.mxu0 0.0
    %1287 = vmatpush1.msra.mxu0 0.0
    %1288 = vmatprep.subr.mxu0 0.0
    %1289 = vmatpush1.msra.mxu0 0.0
    %1290 = vmatprep.subr.mxu0 0.0
    %1291 = vmatpush1.msra.mxu0 0.0
    %1292 = vmatprep.subr.mxu0 0.0
    %1293 = vmatpush1.msra.mxu0 0.0
    %1294 = vmatprep.subr.mxu0 0.0
    %1295 = vmatpush1.msra.mxu0 0.0
    %1296 = vmatprep.subr.mxu0 0.0
    %1297 = vmatpush1.msra.mxu0 0.0
    %1298 = vmatprep.subr.mxu0 0.0
    %1299 = vmatpush1.msra.mxu0 0.0
    %1300 = vmatprep.subr.mxu0 0.0
    %1301 = vmatpush1.msra.mxu0 0.0
    %1302 = vmatprep.subr.mxu0 0.0
    %1303 = vmatpush1.msra.mxu0 0.0
    %1304 = vmatprep.subr.mxu0 0.0
    %1305 = vmatpush1.msra.mxu0 0.0
    %1306 = vmatprep.subr.mxu0 0.0
    %1307 = vmatpush1.msra.mxu0 0.0
    %1308 = vmatprep.subr.mxu0 0.0
    %1309 = vmatpush1.msra.mxu0 0.0
    %1310 = vmatprep.subr.mxu0 0.0
    %1311 = vmatpush1.msra.mxu0 0.0
    %1312 = vmatprep.subr.mxu0 0.0
    %1313 = vmatpush1.msra.mxu0 0.0
    %1314 = vmatprep.subr.mxu0 0.0
    %1315 = vmatpush1.msra.mxu0 0.0
    %1316 = vmatprep.subr.mxu0 0.0
    %1317 = vmatpush1.msra.mxu0 0.0
    %1318 = vmatprep.subr.mxu0 0.0
    %1319 = vmatpush1.msra.mxu0 0.0
    %1320 = vmatprep.subr.mxu0 0.0
    %1321 = vmatpush1.msra.mxu0 0.0
    %1322 = vmatprep.subr.mxu0 0.0
    %1323 = vmatpush1.msra.mxu0 0.0
    %1324 = vmatprep.subr.mxu0 0.0
    %1325 = vmatpush1.msra.mxu0 0.0
    %1326 = vmatprep.subr.mxu0 0.0
    %1327 = vmatpush1.msra.mxu0 0.0
    %1328 = vmatprep.subr.mxu0 0.0
    %1329 = vmatpush1.msra.mxu0 0.0
    %1330 = vmatprep.subr.mxu0 0.0
    %1331 = vmatpush1.msra.mxu0 0.0
    %1332 = vmatprep.mubr.f32.mxu0 0.0
    %1333 = vmatmul.mubr.f32.gmra.mrb[0].mxu0 %v1266
    %v1334 = vpop.f32.mrb[0].mxu0
    %v1335 = vadd.f32 0.0, %v1334
    %v1336 = vpop.f32.mrb[0].mxu0
    %1337 = vdwg.mxu0
    %v1339 = vsel %vm430, %v1110, 0
    %1341 = vmatprep.subr.mxu0 0.0
    %1342 = vmatpush1.msra.mxu0 %v415
    %1343 = vmatprep.subr.mxu0 0.0
    %1344 = vmatpush1.msra.mxu0 0.0
    %1345 = vmatprep.subr.mxu0 0.0
    %1346 = vmatpush1.msra.mxu0 0.0
    %1347 = vmatprep.subr.mxu0 0.0
    %1348 = vmatpush1.msra.mxu0 0.0
    %1349 = vmatprep.subr.mxu0 0.0
    %1350 = vmatpush1.msra.mxu0 0.0
    %1351 = vmatprep.subr.mxu0 0.0
    %1352 = vmatpush1.msra.mxu0 0.0
    %1353 = vmatprep.subr.mxu0 0.0
    %1354 = vmatpush1.msra.mxu0 0.0
    %1355 = vmatprep.subr.mxu0 0.0
    %1356 = vmatpush1.msra.mxu0 0.0
    %1357 = vmatprep.subr.mxu0 0.0
    %1358 = vmatpush1.msra.mxu0 0.0
    %1359 = vmatprep.subr.mxu0 0.0
    %1360 = vmatpush1.msra.mxu0 0.0
    %1361 = vmatprep.subr.mxu0 0.0
    %1362 = vmatpush1.msra.mxu0 0.0
    %1363 = vmatprep.subr.mxu0 0.0
    %1364 = vmatpush1.msra.mxu0 0.0
    %1365 = vmatprep.subr.mxu0 0.0
    %1366 = vmatpush1.msra.mxu0 0.0
    %1367 = vmatprep.subr.mxu0 0.0
    %1368 = vmatpush1.msra.mxu0 0.0
    %1369 = vmatprep.subr.mxu0 0.0
    %1370 = vmatpush1.msra.mxu0 0.0
    %1371 = vmatprep.subr.mxu0 0.0
    %1372 = vmatpush1.msra.mxu0 0.0
    %1373 = vmatprep.subr.mxu0 0.0
    %1374 = vmatpush1.msra.mxu0 0.0
    %1375 = vmatprep.subr.mxu0 0.0
    %1376 = vmatpush1.msra.mxu0 0.0
    %1377 = vmatprep.subr.mxu0 0.0
    %1378 = vmatpush1.msra.mxu0 0.0
    %1379 = vmatprep.subr.mxu0 0.0
    %1380 = vmatpush1.msra.mxu0 0.0
    %1381 = vmatprep.subr.mxu0 0.0
    %1382 = vmatpush1.msra.mxu0 0.0
    %1383 = vmatprep.subr.mxu0 0.0
    %1384 = vmatpush1.msra.mxu0 0.0
    %1385 = vmatprep.subr.mxu0 0.0
    %1386 = vmatpush1.msra.mxu0 0.0
    %1387 = vmatprep.subr.mxu0 0.0
    %1388 = vmatpush1.msra.mxu0 0.0
    %1389 = vmatprep.subr.mxu0 0.0
    %1390 = vmatpush1.msra.mxu0 0.0
    %1391 = vmatprep.subr.mxu0 0.0
    %1392 = vmatpush1.msra.mxu0 0.0
    %1393 = vmatprep.subr.mxu0 0.0
    %1394 = vmatpush1.msra.mxu0 0.0
    %1395 = vmatprep.subr.mxu0 0.0
    %1396 = vmatpush1.msra.mxu0 0.0
    %1397 = vmatprep.subr.mxu0 0.0
    %1398 = vmatpush1.msra.mxu0 0.0
    %1399 = vmatprep.subr.mxu0 0.0
    %1400 = vmatpush1.msra.mxu0 0.0
    %1401 = vmatprep.subr.mxu0 0.0
    %1402 = vmatpush1.msra.mxu0 0.0
    %1403 = vmatprep.subr.mxu0 0.0
    %1404 = vmatpush1.msra.mxu0 0.0
    %1405 = vmatprep.mubr.f32.mxu0 0.0
    %1406 = vmatmul.mubr.f32.gmra.mrb[0].mxu0 %v1339
    %v1407 = vpop.f32.mrb[0].mxu0
    %v1408 = vadd.f32 0.0, %v1407
    %v1409 = vpop.f32.mrb[0].mxu0
    %1410 = vdwg.mxu0
    %v1412 = vsel %vm430, %v1112, 0
    %1414 = vmatprep.subr.mxu0 0.0
    %1415 = vmatpush1.msra.mxu0 %v419
    %1416 = vmatprep.subr.mxu0 0.0
    %1417 = vmatpush1.msra.mxu0 0.0
    %1418 = vmatprep.subr.mxu0 0.0
    %1419 = vmatpush1.msra.mxu0 0.0
    %1420 = vmatprep.subr.mxu0 0.0
    %1421 = vmatpush1.msra.mxu0 0.0
    %1422 = vmatprep.subr.mxu0 0.0
    %1423 = vmatpush1.msra.mxu0 0.0
    %1424 = vmatprep.subr.mxu0 0.0
    %1425 = vmatpush1.msra.mxu0 0.0
    %1426 = vmatprep.subr.mxu0 0.0
    %1427 = vmatpush1.msra.mxu0 0.0
    %1428 = vmatprep.subr.mxu0 0.0
    %1429 = vmatpush1.msra.mxu0 0.0
    %1430 = vmatprep.subr.mxu0 0.0
    %1431 = vmatpush1.msra.mxu0 0.0
    %1432 = vmatprep.subr.mxu0 0.0
    %1433 = vmatpush1.msra.mxu0 0.0
    %1434 = vmatprep.subr.mxu0 0.0
    %1435 = vmatpush1.msra.mxu0 0.0
    %1436 = vmatprep.subr.mxu0 0.0
    %1437 = vmatpush1.msra.mxu0 0.0
    %1438 = vmatprep.subr.mxu0 0.0
    %1439 = vmatpush1.msra.mxu0 0.0
    %1440 = vmatprep.subr.mxu0 0.0
    %1441 = vmatpush1.msra.mxu0 0.0
    %1442 = vmatprep.subr.mxu0 0.0
    %1443 = vmatpush1.msra.mxu0 0.0
    %1444 = vmatprep.subr.mxu0 0.0
    %1445 = vmatpush1.msra.mxu0 0.0
    %1446 = vmatprep.subr.mxu0 0.0
    %1447 = vmatpush1.msra.mxu0 0.0
    %1448 = vmatprep.subr.mxu0 0.0
    %1449 = vmatpush1.msra.mxu0 0.0
    %1450 = vmatprep.subr.mxu0 0.0
    %1451 = vmatpush1.msra.mxu0 0.0
    %1452 = vmatprep.subr.mxu0 0.0
    %1453 = vmatpush1.msra.mxu0 0.0
    %1454 = vmatprep.subr.mxu0 0.0
    %1455 = vmatpush1.msra.mxu0 0.0
    %1456 = vmatprep.subr.mxu0 0.0
    %1457 = vmatpush1.msra.mxu0 0.0
    %1458 = vmatprep.subr.mxu0 0.0
    %1459 = vmatpush1.msra.mxu0 0.0
    %1460 = vmatprep.subr.mxu0 0.0
    %1461 = vmatpush1.msra.mxu0 0.0
    %1462 = vmatprep.subr.mxu0 0.0
    %1463 = vmatpush1.msra.mxu0 0.0
    %1464 = vmatprep.subr.mxu0 0.0
    %1465 = vmatpush1.msra.mxu0 0.0
    %1466 = vmatprep.subr.mxu0 0.0
    %1467 = vmatpush1.msra.mxu0 0.0
    %1468 = vmatprep.subr.mxu0 0.0
    %1469 = vmatpush1.msra.mxu0 0.0
    %1470 = vmatprep.subr.mxu0 0.0
    %1471 = vmatpush1.msra.mxu0 0.0
    %1472 = vmatprep.subr.mxu0 0.0
    %1473 = vmatpush1.msra.mxu0 0.0
    %1474 = vmatprep.subr.mxu0 0.0
    %1475 = vmatpush1.msra.mxu0 0.0
    %1476 = vmatprep.subr.mxu0 0.0
    %1477 = vmatpush1.msra.mxu0 0.0
    %1478 = vmatprep.mubr.f32.mxu0 0.0
    %1479 = vmatmul.mubr.f32.gmra.mrb[0].mxu0 %v1412
    %v1480 = vpop.f32.mrb[0].mxu0
    %v1481 = vadd.f32 0.0, %v1480
    %v1482 = vpop.f32.mrb[0].mxu0
    %1483 = vdwg.mxu0
    %v1485 = vsel %vm430, %v1114, 0
    %1487 = vmatprep.subr.mxu0 0.0
    %1488 = vmatpush1.msra.mxu0 %v421
    %1489 = vmatprep.subr.mxu0 0.0
    %1490 = vmatpush1.msra.mxu0 0.0
    %1491 = vmatprep.subr.mxu0 0.0
    %1492 = vmatpush1.msra.mxu0 0.0
    %1493 = vmatprep.subr.mxu0 0.0
    %1494 = vmatpush1.msra.mxu0 0.0
    %1495 = vmatprep.subr.mxu0 0.0
    %1496 = vmatpush1.msra.mxu0 0.0
    %1497 = vmatprep.subr.mxu0 0.0
    %1498 = vmatpush1.msra.mxu0 0.0
    %1499 = vmatprep.subr.mxu0 0.0
    %1500 = vmatpush1.msra.mxu0 0.0
    %1501 = vmatprep.subr.mxu0 0.0
    %1502 = vmatpush1.msra.mxu0 0.0
    %1503 = vmatprep.subr.mxu0 0.0
    %1504 = vmatpush1.msra.mxu0 0.0
    %1505 = vmatprep.subr.mxu0 0.0
    %1506 = vmatpush1.msra.mxu0 0.0
    %1507 = vmatprep.subr.mxu0 0.0
    %1508 = vmatpush1.msra.mxu0 0.0
    %1509 = vmatprep.subr.mxu0 0.0
    %1510 = vmatpush1.msra.mxu0 0.0
    %1511 = vmatprep.subr.mxu0 0.0
    %1512 = vmatpush1.msra.mxu0 0.0
    %1513 = vmatprep.subr.mxu0 0.0
    %1514 = vmatpush1.msra.mxu0 0.0
    %1515 = vmatprep.subr.mxu0 0.0
    %1516 = vmatpush1.msra.mxu0 0.0
    %1517 = vmatprep.subr.mxu0 0.0
    %1518 = vmatpush1.msra.mxu0 0.0
    %1519 = vmatprep.subr.mxu0 0.0
    %1520 = vmatpush1.msra.mxu0 0.0
    %1521 = vmatprep.subr.mxu0 0.0
    %1522 = vmatpush1.msra.mxu0 0.0
    %1523 = vmatprep.subr.mxu0 0.0
    %1524 = vmatpush1.msra.mxu0 0.0
    %1525 = vmatprep.subr.mxu0 0.0
    %1526 = vmatpush1.msra.mxu0 0.0
    %1527 = vmatprep.subr.mxu0 0.0
    %1528 = vmatpush1.msra.mxu0 0.0
    %1529 = vmatprep.subr.mxu0 0.0
    %1530 = vmatpush1.msra.mxu0 0.0
    %1531 = vmatprep.subr.mxu0 0.0
    %1532 = vmatpush1.msra.mxu0 0.0
    %1533 = vmatprep.subr.mxu0 0.0
    %1534 = vmatpush1.msra.mxu0 0.0
    %1535 = vmatprep.subr.mxu0 0.0
    %1536 = vmatpush1.msra.mxu0 0.0
    %1537 = vmatprep.subr.mxu0 0.0
    %1538 = vmatpush1.msra.mxu0 0.0
    %1539 = vmatprep.subr.mxu0 0.0
    %1540 = vmatpush1.msra.mxu0 0.0
    %1541 = vmatprep.subr.mxu0 0.0
    %1542 = vmatpush1.msra.mxu0 0.0
    %1543 = vmatprep.subr.mxu0 0.0
    %1544 = vmatpush1.msra.mxu0 0.0
    %1545 = vmatprep.subr.mxu0 0.0
    %1546 = vmatpush1.msra.mxu0 0.0
    %1547 = vmatprep.subr.mxu0 0.0
    %1548 = vmatpush1.msra.mxu0 0.0
    %1549 = vmatprep.subr.mxu0 0.0
    %1550 = vmatpush1.msra.mxu0 0.0
    %1551 = vmatprep.mubr.f32.mxu0 0.0
    %1552 = vmatmul.mubr.f32.gmra.mrb[0].mxu0 %v1485
    %v1553 = vpop.f32.mrb[0].mxu0
    %v1554 = vadd.f32 0.0, %v1553
    %v1555 = vpop.f32.mrb[0].mxu0
    %1556 = vdwg.mxu0
    %v1558 = vsel %vm430, %v1116, 0
    %1560 = vmatprep.subr.mxu0 0.0
    %1561 = vmatpush1.msra.mxu0 %v425
    %1562 = vmatprep.subr.mxu0 0.0
    %1563 = vmatpush1.msra.mxu0 0.0
    %1564 = vmatprep.subr.mxu0 0.0
    %1565 = vmatpush1.msra.mxu0 0.0
    %1566 = vmatprep.subr.mxu0 0.0
    %1567 = vmatpush1.msra.mxu0 0.0
    %1568 = vmatprep.subr.mxu0 0.0
    %1569 = vmatpush1.msra.mxu0 0.0
    %1570 = vmatprep.subr.mxu0 0.0
    %1571 = vmatpush1.msra.mxu0 0.0
    %1572 = vmatprep.subr.mxu0 0.0
    %1573 = vmatpush1.msra.mxu0 0.0
    %1574 = vmatprep.subr.mxu0 0.0
    %1575 = vmatpush1.msra.mxu0 0.0
    %1576 = vmatprep.subr.mxu0 0.0
    %1577 = vmatpush1.msra.mxu0 0.0
    %1578 = vmatprep.subr.mxu0 0.0
    %1579 = vmatpush1.msra.mxu0 0.0
    %1580 = vmatprep.subr.mxu0 0.0
    %1581 = vmatpush1.msra.mxu0 0.0
    %1582 = vmatprep.subr.mxu0 0.0
    %1583 = vmatpush1.msra.mxu0 0.0
    %1584 = vmatprep.subr.mxu0 0.0
    %1585 = vmatpush1.msra.mxu0 0.0
    %1586 = vmatprep.subr.mxu0 0.0
    %1587 = vmatpush1.msra.mxu0 0.0
    %1588 = vmatprep.subr.mxu0 0.0
    %1589 = vmatpush1.msra.mxu0 0.0
    %1590 = vmatprep.subr.mxu0 0.0
    %1591 = vmatpush1.msra.mxu0 0.0
    %1592 = vmatprep.subr.mxu0 0.0
    %1593 = vmatpush1.msra.mxu0 0.0
    %1594 = vmatprep.subr.mxu0 0.0
    %1595 = vmatpush1.msra.mxu0 0.0
    %1596 = vmatprep.subr.mxu0 0.0
    %1597 = vmatpush1.msra.mxu0 0.0
    %1598 = vmatprep.subr.mxu0 0.0
    %1599 = vmatpush1.msra.mxu0 0.0
    %1600 = vmatprep.subr.mxu0 0.0
    %1601 = vmatpush1.msra.mxu0 0.0
    %1602 = vmatprep.subr.mxu0 0.0
    %1603 = vmatpush1.msra.mxu0 0.0
    %1604 = vmatprep.subr.mxu0 0.0
    %1605 = vmatpush1.msra.mxu0 0.0
    %1606 = vmatprep.subr.mxu0 0.0
    %1607 = vmatpush1.msra.mxu0 0.0
    %1608 = vmatprep.subr.mxu0 0.0
    %1609 = vmatpush1.msra.mxu0 0.0
    %1610 = vmatprep.subr.mxu0 0.0
    %1611 = vmatpush1.msra.mxu0 0.0
    %1612 = vmatprep.subr.mxu0 0.0
    %1613 = vmatpush1.msra.mxu0 0.0
    %1614 = vmatprep.subr.mxu0 0.0
    %1615 = vmatpush1.msra.mxu0 0.0
    %1616 = vmatprep.subr.mxu0 0.0
    %1617 = vmatpush1.msra.mxu0 0.0
    %1618 = vmatprep.subr.mxu0 0.0
    %1619 = vmatpush1.msra.mxu0 0.0
    %1620 = vmatprep.subr.mxu0 0.0
    %1621 = vmatpush1.msra.mxu0 0.0
    %1622 = vmatprep.subr.mxu0 0.0
    %1623 = vmatpush1.msra.mxu0 0.0
    %1624 = vmatprep.mubr.f32.mxu0 0.0
    %1625 = vmatmul.mubr.f32.gmra.mrb[0].mxu0 %v1558
    %v1626 = vpop.f32.mrb[0].mxu0
    %v1627 = vadd.f32 0.0, %v1626
    %v1628 = vpop.f32.mrb[0].mxu0
    %1629 = vdwg.mxu0
    %v1631 = vsel %vm430, %v1118, 0
    %1633 = vmatprep.subr.mxu0 0.0
    %1634 = vmatpush1.msra.mxu0 %v427
    %1635 = vmatprep.subr.mxu0 0.0
    %1636 = vmatpush1.msra.mxu0 0.0
    %1637 = vmatprep.subr.mxu0 0.0
    %1638 = vmatpush1.msra.mxu0 0.0
    %1639 = vmatprep.subr.mxu0 0.0
    %1640 = vmatpush1.msra.mxu0 0.0
    %1641 = vmatprep.subr.mxu0 0.0
    %1642 = vmatpush1.msra.mxu0 0.0
    %1643 = vmatprep.subr.mxu0 0.0
    %1644 = vmatpush1.msra.mxu0 0.0
    %1645 = vmatprep.subr.mxu0 0.0
    %1646 = vmatpush1.msra.mxu0 0.0
    %1647 = vmatprep.subr.mxu0 0.0
    %1648 = vmatpush1.msra.mxu0 0.0
    %1649 = vmatprep.subr.mxu0 0.0
    %1650 = vmatpush1.msra.mxu0 0.0
    %1651 = vmatprep.subr.mxu0 0.0
    %1652 = vmatpush1.msra.mxu0 0.0
    %1653 = vmatprep.subr.mxu0 0.0
    %1654 = vmatpush1.msra.mxu0 0.0
    %1655 = vmatprep.subr.mxu0 0.0
    %1656 = vmatpush1.msra.mxu0 0.0
    %1657 = vmatprep.subr.mxu0 0.0
    %1658 = vmatpush1.msra.mxu0 0.0
    %1659 = vmatprep.subr.mxu0 0.0
    %1660 = vmatpush1.msra.mxu0 0.0
    %1661 = vmatprep.subr.mxu0 0.0
    %1662 = vmatpush1.msra.mxu0 0.0
    %1663 = vmatprep.subr.mxu0 0.0
    %1664 = vmatpush1.msra.mxu0 0.0
    %1665 = vmatprep.subr.mxu0 0.0
    %1666 = vmatpush1.msra.mxu0 0.0
    %1667 = vmatprep.subr.mxu0 0.0
    %1668 = vmatpush1.msra.mxu0 0.0
    %1669 = vmatprep.subr.mxu0 0.0
    %1670 = vmatpush1.msra.mxu0 0.0
    %1671 = vmatprep.subr.mxu0 0.0
    %1672 = vmatpush1.msra.mxu0 0.0
    %1673 = vmatprep.subr.mxu0 0.0
    %1674 = vmatpush1.msra.mxu0 0.0
    %1675 = vmatprep.subr.mxu0 0.0
    %1676 = vmatpush1.msra.mxu0 0.0
    %1677 = vmatprep.subr.mxu0 0.0
    %1678 = vmatpush1.msra.mxu0 0.0
    %1679 = vmatprep.subr.mxu0 0.0
    %1680 = vmatpush1.msra.mxu0 0.0
    %1681 = vmatprep.subr.mxu0 0.0
    %1682 = vmatpush1.msra.mxu0 0.0
    %1683 = vmatprep.subr.mxu0 0.0
    %1684 = vmatpush1.msra.mxu0 0.0
    %1685 = vmatprep.subr.mxu0 0.0
    %1686 = vmatpush1.msra.mxu0 0.0
    %1687 = vmatprep.subr.mxu0 0.0
    %1688 = vmatpush1.msra.mxu0 0.0
    %1689 = vmatprep.subr.mxu0 0.0
    %1690 = vmatpush1.msra.mxu0 0.0
    %1691 = vmatprep.subr.mxu0 0.0
    %1692 = vmatpush1.msra.mxu0 0.0
    %1693 = vmatprep.subr.mxu0 0.0
    %1694 = vmatpush1.msra.mxu0 0.0
    %1695 = vmatprep.subr.mxu0 0.0
    %1696 = vmatpush1.msra.mxu0 0.0
    %1697 = vmatprep.mubr.f32.mxu0 0.0
    %1698 = vmatmul.mubr.f32.gmra.mrb[0].mxu0 %v1631
    %v1699 = vpop.f32.mrb[0].mxu0
    %v1700 = vadd.f32 0.0, %v1699
    %v1701 = vpop.f32.mrb[0].mxu0
    %1702 = vdwg.mxu0
    %1705 = vrot.lane.b32.xlu0 %v1335, 8
    %v1706 = vpop.permute.xlu0 %1705
    %1707 = vrot.lane.b32.xlu0 %v1408, 8
    %v1708 = vpop.permute.xlu0 %1707
    %1713 = vrot.lane.b32.xlu0 %v1481, 16
    %v1714 = vpop.permute.xlu0 %1713
    %1715 = vrot.lane.b32.xlu0 %v1554, 16
    %v1716 = vpop.permute.xlu0 %1715
    %1721 = vrot.lane.b32.xlu0 %v1627, 24
    %v1722 = vpop.permute.xlu0 %1721
    %1723 = vrot.lane.b32.xlu0 %v1700, 24
    %v1724 = vpop.permute.xlu0 %1723
    %v1727 = vsel %vm430, %v1189, %v1706
    %v1728 = vsel %vm430, %v1262, %v1708
    %vm1729 = vcmask 130048
    %v1730 = vsel %vm1729, %v1727, %v1714
    %v1731 = vsel %vm1729, %v1728, %v1716
    %vm1732 = vcmask 195584
    %v1733 = vsel %vm1732, %v1730, %v1722
    %v1734 = vsel %vm1732, %v1731, %v1724
    %v1735 = vld [vmem:[#allocation10] sm:$0xff]
    %v1736 = vld [vmem:[#allocation10 + $0x8] sm:$0xff]
    %v1737 = vld [vmem:[#allocation10 + $0x10] sm:$0xff]
    %v1738 = vld [vmem:[#allocation10 + $0x18] sm:$0xff]
    %v1739 = vld [vmem:[%s6] sm:$0x1]
    %v1741 = vlaneseq
    %v1742 = vshrl.u32 %v1741, 7
    %v1743 = vsub.s32 0, %v1742
    %v1744 = vrot.slane %v1739, %v1743
    %v1747 = vsel %vm112, %v1733, 0
    %v1750 = vsel %vm112, %v1734, 0
    %1752 = vmatprep.subr.mxu0 0.0
    %1753 = vmatpush1.msra.mxu0 %v1735
    %1754 = vmatprep.subr.mxu0 0.0
    %1755 = vmatpush1.msra.mxu0 %v1736
    %1756 = vmatprep.subr.mxu0 0.0
    %1757 = vmatpush1.msra.mxu0 %v1737
    %1758 = vmatprep.subr.mxu0 0.0
    %1759 = vmatpush1.msra.mxu0 %v1738
    %1760 = vmatprep.subr.mxu0 0.0
    %1761 = vmatpush1.msra.mxu0 0.0
    %1762 = vmatprep.subr.mxu0 0.0
    %1763 = vmatpush1.msra.mxu0 0.0
    %1764 = vmatprep.subr.mxu0 0.0
    %1765 = vmatpush1.msra.mxu0 0.0
    %1766 = vmatprep.subr.mxu0 0.0
    %1767 = vmatpush1.msra.mxu0 0.0
    %1768 = vmatprep.subr.mxu0 0.0
    %1769 = vmatpush1.msra.mxu0 0.0
    %1770 = vmatprep.subr.mxu0 0.0
    %1771 = vmatpush1.msra.mxu0 0.0
    %1772 = vmatprep.subr.mxu0 0.0
    %1773 = vmatpush1.msra.mxu0 0.0
    %1774 = vmatprep.subr.mxu0 0.0
    %1775 = vmatpush1.msra.mxu0 0.0
    %1776 = vmatprep.subr.mxu0 0.0
    %1777 = vmatpush1.msra.mxu0 0.0
    %1778 = vmatprep.subr.mxu0 0.0
    %1779 = vmatpush1.msra.mxu0 0.0
    %1780 = vmatprep.subr.mxu0 0.0
    %1781 = vmatpush1.msra.mxu0 0.0
    %1782 = vmatprep.subr.mxu0 0.0
    %1783 = vmatpush1.msra.mxu0 0.0
    %1784 = vmatprep.subr.mxu0 0.0
    %1785 = vmatpush1.msra.mxu0 0.0
    %1786 = vmatprep.subr.mxu0 0.0
    %1787 = vmatpush1.msra.mxu0 0.0
    %1788 = vmatprep.subr.mxu0 0.0
    %1789 = vmatpush1.msra.mxu0 0.0
    %1790 = vmatprep.subr.mxu0 0.0
    %1791 = vmatpush1.msra.mxu0 0.0
    %1792 = vmatprep.subr.mxu0 0.0
    %1793 = vmatpush1.msra.mxu0 0.0
    %1794 = vmatprep.subr.mxu0 0.0
    %1795 = vmatpush1.msra.mxu0 0.0
    %1796 = vmatprep.subr.mxu0 0.0
    %1797 = vmatpush1.msra.mxu0 0.0
    %1798 = vmatprep.subr.mxu0 0.0
    %1799 = vmatpush1.msra.mxu0 0.0
    %1800 = vmatprep.subr.mxu0 0.0
    %1801 = vmatpush1.msra.mxu0 0.0
    %1802 = vmatprep.subr.mxu0 0.0
    %1803 = vmatpush1.msra.mxu0 0.0
    %1804 = vmatprep.subr.mxu0 0.0
    %1805 = vmatpush1.msra.mxu0 0.0
    %1806 = vmatprep.subr.mxu0 0.0
    %1807 = vmatpush1.msra.mxu0 0.0
    %1808 = vmatprep.subr.mxu0 0.0
    %1809 = vmatpush1.msra.mxu0 0.0
    %1810 = vmatprep.subr.mxu0 0.0
    %1811 = vmatpush1.msra.mxu0 0.0
    %1812 = vmatprep.subr.mxu0 0.0
    %1813 = vmatpush1.msra.mxu0 0.0
    %1814 = vmatprep.subr.mxu0 0.0
    %1815 = vmatpush1.msra.mxu0 0.0
    %1816 = vmatprep.mubr.f32.mxu0 0.0
    %1817 = vmatmul.mubr.f32.gmra.mrb[0].mxu0 %v1747
    %v1818 = vpop.f32.mrb[0].mxu0
    %v1819 = vadd.f32 %v1744, %v1818
    %v1820 = vpop.f32.mrb[0].mxu0
    %1821 = vmatprep.mubr.f32.mxu0 0.0
    %1822 = vmatmul.mubr.f32.gmra.mrb[0].mxu0 %v1750
    %v1823 = vpop.f32.mrb[0].mxu0
    %v1824 = vadd.f32 %v1744, %v1823
    %v1825 = vpop.f32.mrb[0].mxu0
    %1826 = vdwg.mxu0
    %1827 = vst.msk [vmem:[#allocation11] sm:$0xff] %vm112, %v1819
    %1828 = vst.msk [vmem:[#allocation11 + $0x8] sm:$0xff] %vm112, %v1824
    // Predicated region
    $region50: #{tpu_custom_call.1} parent=1 // pred_check
      _
    $region51: #{tpu_custom_call.1} parent=1 // pred_check_branch
      %1830 = sbr.rel (0) target = $region53
    $region52: #{tpu_custom_call.1} parent=1 // pred_region
      %s1832 = ssub.s32 256, 256
      %1833 = vsyncadd [#allocation4], %s1832
      %s1834 = sshll.u32 [#allocation11], 4
      %s1835 = int_to_ptr.vmem [resolvable:$true] %s1834
      %1840 = dma.vmem_to_hbm [thread:$0]  %s1835, 256, %s7, [#allocation4], 128, 128, 8
    $region53: #{tpu_custom_call.1} parent=1 // pred_fallthru
      _
    // Predicated region
    $region54: #{tpu_custom_call.1} parent=1 // pred_check
      _
    $region55: #{tpu_custom_call.1} parent=1 // pred_check_branch
      %1842 = sbr.rel (0) target = $region57
    $region56: #{tpu_custom_call.1} parent=1 // pred_region
      %1843 = dma.done [#allocation4], 256
    $region57: #{tpu_custom_call.1} parent=1 // pred_fallthru
      _
    %1844 = vsyncpa [#allocation3], 1
    %1845 = vsyncpa [#allocation6], 1
    %1846 = vsyncpa [#allocation9], 1
    %1847 = vsyncpa [#allocation4], 1

</llo_original>
